<compile_context>
chip_gen: v6e
topology: v6e:2x2x1
jax: 0.10.0
libtpu: 0.0.40
codegen_flags: <defaults>
</compile_context>

<pallas_src>
import functools

import numpy as np

import jax
import jax.numpy as jnp
from jax import lax
from jax.experimental import pallas as pl
from jax.experimental.pallas import tpu as pltpu

BN_EPS = 1e-5
_PAD = 128  # halo pad (lanes) on each side of the depthwise staging buffer


def _round_up(n, m):
    return ((n + m - 1) // m) * m


# ------------------------------ fused kernel --------------------------------

def shufflenet_unit_kernel(x_ref, w1_ref, sh1_ref, wdw_ref, msk_ref, w2_ref,
                           sh2_ref, o_ref, hp_ref, *, W, bpb):
    # x_ref  : (bpb, Cin, Lp)   dense flattened input (f32), Lp = pad128(H*W)
    # w1_ref : (hidden, Cin)    bf16, block-diag gconv1, BN scale + shuffle folded
    # sh1_ref: (hidden, 1)      f32 folded shift (applied before ReLU)
    # wdw_ref: (hidden, 9)      f32 depthwise taps (post-shuffle channel order)
    # msk_ref: (8, Lp)          rows 0-2: row-validity for dh=0..2,
    #                           rows 3-5: col-validity for dw=0..2 (f32 0/1)
    # w2_ref : (Cout, hidden)   bf16, block-diag gconv2 with BN2 & dw-BN folded
    # sh2_ref: (Cout, 1)        f32 folded shift
    # o_ref  : (bpb, Cout, Lp)  output, same dense frame as the input
    # hp_ref : (hidden, Lp+2*_PAD) VMEM staging buffer for the 3x3 taps
    hidden = hp_ref.shape[0]
    Lp = msk_ref.shape[1]

    # zero the halo pads once per step (the data region is rewritten below)
    hp_ref[:, :_PAD] = jnp.zeros((hidden, _PAD), jnp.float32)
    hp_ref[:, _PAD + Lp:_PAD + Lp + _PAD] = jnp.zeros((hidden, _PAD), jnp.float32)

    w1 = w1_ref[...]
    sh1 = sh1_ref[...]
    wdw = wdw_ref[...]
    msk = msk_ref[...]
    w2 = w2_ref[...]
    sh2 = sh2_ref[...]

    # combined per-lane validity masks for the 9 taps (center tap needs none)
    tap_mask = []
    for dh in range(3):
        for dw in range(3):
            if dh == 1 and dw == 1:
                tap_mask.append(None)
            else:
                tap_mask.append(msk[dh:dh + 1, :] * msk[3 + dw:4 + dw, :])

    for b in range(bpb):
        xb = x_ref[b]                                           # (Cin, Lp) f32

        # --- stage 1: grouped 1x1 down (+BN, ReLU); shuffle folded into W1
        h = jnp.dot(w1, xb.astype(jnp.bfloat16),
                    preferred_element_type=jnp.float32)         # (hidden, Lp)
        hp_ref[:, _PAD:_PAD + Lp] = jnp.maximum(h + sh1, 0.0)

        # --- stage 2: depthwise 3x3 (stride 1, pad 1) as 9 shifted taps
        acc = jnp.zeros((hidden, Lp), jnp.float32)
        for dh in range(3):
            for dw in range(3):
                t = dh * 3 + dw
                s = (dh - 1) * W + (dw - 1)
                tap = hp_ref[:, _PAD + s:_PAD + s + Lp]          # (hidden, Lp)
                if tap_mask[t] is not None:
                    tap = tap * tap_mask[t]
                acc = acc + tap * wdw[:, t:t + 1]

        # --- stage 3: grouped 1x1 up (+dwBN+BN2 folded) + residual + ReLU
        y = jnp.dot(w2, acc.astype(jnp.bfloat16),
                    preferred_element_type=jnp.float32)          # (Cout, Lp)
        o_ref[b] = jnp.maximum(y + sh2 + xb, 0.0).astype(o_ref.dtype)


# ------------------------------ glue (plain JAX) ----------------------------

def fold_bn(conv_bias, gamma, beta, mean, var):
    sc = gamma / jnp.sqrt(var + BN_EPS)
    sh = (conv_bias - mean) * sc + beta
    return sc, sh


def _block_diag(w):
    # w: (G, r, c) -> (G*r, G*c) block-diagonal
    G, r, c = w.shape
    eye = jnp.eye(G, dtype=w.dtype)
    return jnp.einsum("grc,gh->grhc", w, eye).reshape(G * r, G * c)


def shufflenet_unit_pallas(x, p, num_groups, max_parallel_blocks=2):
    B, Cin, H, W = x.shape
    G = num_groups
    hidden = p["w_dw"].shape[-1]
    Cout = p["w2"].shape[0] * p["w2"].shape[2]
    assert Cin == Cout, "stride=1 identity shortcut requires Cin == Cout"
    assert Cin % G == 0 and hidden % G == 0
    assert W + 1 <= _PAD

    L = H * W
    Lp = _round_up(L, 128)

    # ---- fold BN (+ conv bias) into per-channel scale/shift
    sc1, sh1 = fold_bn(p["b1"], p["g1"], p["be1"], p["m1"], p["v1"])
    sc_dw, sh_dw = fold_bn(p["b_dw"], p["g_dw"], p["be_dw"], p["m_dw"], p["v_dw"])
    sc2, sh2 = fold_bn(p["b2"], p["g2"], p["be2"], p["m2"], p["v2"])

    # ---- block-diagonal 1x1 weights; fold BN scales + channel shuffle in
    # post-shuffle channel c reads pre-shuffle channel (c % G)*chid + c // G
    chid_g = hidden // G
    perm = (np.arange(hidden) % G) * chid_g + np.arange(hidden) // G
    w1_bd = _block_diag(jnp.transpose(p["w1"], (0, 2, 1)))        # (hidden, Cin)
    w1f = (sc1[:, None] * w1_bd)[perm]                            # scale + shuffle
    sh1f = sh1[perm]
    w2_bd = _block_diag(jnp.transpose(p["w2"], (0, 2, 1)))        # (Cout, hidden)
    w2f = sc2[:, None] * w2_bd * sc_dw[None, :]                   # dwBN + BN2 folded
    sh2f = sc2 * (w2_bd @ sh_dw) + sh2
    wdw = jnp.transpose(p["w_dw"], (2, 0, 1)).reshape(hidden, 9)

    # ---- per-lane row/col validity masks for the 9 dw taps (trace-time const)
    pos = np.arange(Lp)
    row = pos // W
    col = pos % W
    msk = np.zeros((8, Lp), np.float32)
    msk[0] = row >= 1            # dh = 0 reads row-1
    msk[1] = 1.0                 # dh = 1
    msk[2] = row <= H - 2        # dh = 2 reads row+1
    msk[3] = col >= 1            # dw = 0 reads col-1
    msk[4] = 1.0                 # dw = 1
    msk[5] = col <= W - 2        # dw = 2 reads col+1
    msk = jnp.asarray(msk)

    # ---- layout: NCHW -> dense flat (B, Cin, Lp); reshape only (no HBM pass
    # when H*W is already a multiple of 128)
    xf = x.reshape(B, Cin, L)
    if Lp != L:
        xf = jnp.pad(xf, ((0, 0), (0, 0), (0, Lp - L)))

    # ---- batch blocking: >= 2 "parallel" grid steps for v7x megacore; the
    # rest of the batch is folded into each step (set max_parallel_blocks=1 on
    # single-TC v5e/v6e to fold everything into one step).
    nblk = max(1, min(B, max_parallel_blocks))
    while B % nblk:
        nblk -= 1
    bpb = B // nblk

    kernel = functools.partial(shufflenet_unit_kernel, W=W, bpb=bpb)
    flops = B * Lp * (2 * hidden * Cin + 27 * hidden + 2 * Cout * hidden + 3 * Cout)
    bytes_acc = (xf.size + B * Cout * Lp) * 4 \
        + (w1f.size + w2f.size) * 2 \
        + (wdw.size + msk.size + hidden + Cout) * 4

    out = pl.pallas_call(
        kernel,
        grid=(nblk,),
        in_specs=[
            pl.BlockSpec((bpb, Cin, Lp), lambda i: (i, 0, 0)),
            pl.BlockSpec((hidden, Cin), lambda i: (0, 0)),
            pl.BlockSpec((hidden, 1), lambda i: (0, 0)),
            pl.BlockSpec((hidden, 9), lambda i: (0, 0)),
            pl.BlockSpec((8, Lp), lambda i: (0, 0)),
            pl.BlockSpec((Cout, hidden), lambda i: (0, 0)),
            pl.BlockSpec((Cout, 1), lambda i: (0, 0)),
        ],
        out_specs=pl.BlockSpec((bpb, Cout, Lp), lambda i: (i, 0, 0)),
        out_shape=jax.ShapeDtypeStruct((B, Cout, Lp), jnp.float32),
        scratch_shapes=[pltpu.VMEM((hidden, Lp + 2 * _PAD), jnp.float32)],
        compiler_params=pltpu.CompilerParams(dimension_semantics=("parallel",)),
        cost_estimate=pl.CostEstimate(flops=int(flops), transcendentals=0,
                                      bytes_accessed=int(bytes_acc)),
    )(xf,
      w1f.astype(jnp.bfloat16), sh1f.reshape(hidden, 1),
      wdw, msk,
      w2f.astype(jnp.bfloat16), sh2f.reshape(Cout, 1))

    if Lp != L:
        out = out[:, :, :L]
    return out.reshape(B, Cout, H, W)


# ----------------------- deterministic parameter init -----------------------

def init_params(key, in_channels, out_channels, num_groups, bottleneck_scale=0.25):
    G = num_groups
    hidden = int(bottleneck_scale * out_channels)
    cin_g, chid_g, cout_g = in_channels // G, hidden // G, out_channels // G
    ks = jax.random.split(key, 18)
    n = lambda k, shape: jax.random.normal(k, shape, jnp.float32)
    p = {}
    # gconv1x1_down (groups=G) + BN1
    p["w1"] = 0.1 * n(ks[0], (G, cin_g, chid_g))
    p["b1"] = 0.1 * n(ks[1], (hidden,))
    p["g1"] = 1.0 + 0.1 * n(ks[2], (hidden,))
    p["be1"] = 0.1 * n(ks[3], (hidden,))
    p["m1"] = 0.1 * n(ks[4], (hidden,))
    p["v1"] = 0.5 + jnp.abs(n(ks[5], (hidden,)))
    # depthwise 3x3 (channels indexed in post-shuffle order) + BN
    p["w_dw"] = 0.1 * n(ks[6], (3, 3, hidden))
    p["b_dw"] = 0.1 * n(ks[7], (hidden,))
    p["g_dw"] = 1.0 + 0.1 * n(ks[8], (hidden,))
    p["be_dw"] = 0.1 * n(ks[9], (hidden,))
    p["m_dw"] = 0.1 * n(ks[10], (hidden,))
    p["v_dw"] = 0.5 + jnp.abs(n(ks[11], (hidden,)))
    # gconv1x1_up (groups=G) + BN2
    p["w2"] = 0.1 * n(ks[12], (G, chid_g, cout_g))
    p["b2"] = 0.1 * n(ks[13], (out_channels,))
    p["g2"] = 1.0 + 0.1 * n(ks[14], (out_channels,))
    p["be2"] = 0.1 * n(ks[15], (out_channels,))
    p["m2"] = 0.1 * n(ks[16], (out_channels,))
    p["v2"] = 0.5 + jnp.abs(n(ks[17], (out_channels,)))
    return p


# ------------------------ pure-JAX reference (check) ------------------------

def _bn_ref(z, gamma, beta, mean, var):
    b = lambda v: v[None, :, None, None]
    return b(gamma) * (z - b(mean)) / jnp.sqrt(b(var) + BN_EPS) + b(beta)


def shufflenet_unit_ref(x, p, num_groups):
    G = num_groups
    dn = ("NCHW", "OIHW", "NCHW")
    hi = lax.Precision.HIGHEST

    cin_g = p["w1"].shape[1]
    w1 = p["w1"].transpose(0, 2, 1).reshape(-1, cin_g)[:, :, None, None]
    z = lax.conv_general_dilated(x, w1, (1, 1), "VALID", dimension_numbers=dn,
                                 feature_group_count=G, precision=hi)
    z = z + p["b1"][None, :, None, None]
    z = jnp.maximum(_bn_ref(z, p["g1"], p["be1"], p["m1"], p["v1"]), 0.0)

    B, C, H, W = z.shape
    z = z.reshape(B, G, C // G, H, W).transpose(0, 2, 1, 3, 4).reshape(B, C, H, W)

    wd = p["w_dw"].transpose(2, 0, 1)[:, None, :, :]
    z = lax.conv_general_dilated(z, wd, (1, 1), ((1, 1), (1, 1)),
                                 dimension_numbers=dn, feature_group_count=C,
                                 precision=hi)
    z = z + p["b_dw"][None, :, None, None]
    z = _bn_ref(z, p["g_dw"], p["be_dw"], p["m_dw"], p["v_dw"])

    cmid_g = p["w2"].shape[1]
    w2 = p["w2"].transpose(0, 2, 1).reshape(-1, cmid_g)[:, :, None, None]
    z = lax.conv_general_dilated(z, w2, (1, 1), "VALID", dimension_numbers=dn,
                                 feature_group_count=G, precision=hi)
    z = z + p["b2"][None, :, None, None]
    z = _bn_ref(z, p["g2"], p["be2"], p["m2"], p["v2"])
    return jnp.maximum(z + x, 0.0)


# ----------------------------------- main -----------------------------------

if __name__ == "__main__":
    B, Cin, H, W = 4, 32, 16, 16
    Cout, G, stride = 32, 4, 1          # stride=1 unit: identity shortcut + add

    key = jax.random.PRNGKey(0)
    kx, kp = jax.random.split(key)
    x = jax.random.normal(kx, (B, Cin, H, W), jnp.float32)
    params = init_params(kp, Cin, Cout, G)

    fwd = jax.jit(functools.partial(shufflenet_unit_pallas, num_groups=G))
    y = fwd(x, params)
    jax.block_until_ready(y)

    y_ref = shufflenet_unit_ref(x, params, G)
    assert y.shape == (B, Cout, H, W)
    max_err = float(jnp.max(jnp.abs(y - y_ref)))
    # bf16 MXU passes vs f32 HIGHEST reference -> slightly relaxed tolerance
    assert jnp.allclose(y, y_ref, atol=2e-2, rtol=2e-2), f"max_err={max_err}"
    print("KERNEL_OK")
</pallas_src>

<mosaic_0001>
module attributes {stable_mosaic.version = 11 : i64} {
  func.func @shufflenet_unit_kernel(%arg0: i32, %arg1: memref<2x32x256xf32, #tpu.memory_space<vmem>>, %arg2: memref<8x32xbf16, #tpu.memory_space<vmem>>, %arg3: memref<8x1xf32, #tpu.memory_space<vmem>>, %arg4: memref<8x9xf32, #tpu.memory_space<vmem>>, %arg5: memref<8x256xf32, #tpu.memory_space<vmem>>, %arg6: memref<32x8xbf16, #tpu.memory_space<vmem>>, %arg7: memref<32x1xf32, #tpu.memory_space<vmem>>, %arg8: memref<2x32x256xf32, #tpu.memory_space<vmem>>, %arg9: memref<8x512xf32, #tpu.memory_space<vmem>>) attributes {dimension_semantics = [#tpu.dimension_semantics<parallel>], iteration_bounds = array<i64: 2>, scalar_prefetch = 0 : i64, scratch_operands = 1 : i64, tpu.core_type = #tpu.core_type<tc>, window_params = [{transform_indices = @transform_0, window_bounds = array<i64: 2, 32, 256>}, {pipeline_mode = #tpu.pipeline_mode<synchronous>, transform_indices = @transform_1, window_bounds = array<i64: 8, 32>}, {pipeline_mode = #tpu.pipeline_mode<synchronous>, transform_indices = @transform_2, window_bounds = array<i64: 8, 1>}, {pipeline_mode = #tpu.pipeline_mode<synchronous>, transform_indices = @transform_3, window_bounds = array<i64: 8, 9>}, {pipeline_mode = #tpu.pipeline_mode<synchronous>, transform_indices = @transform_4, window_bounds = array<i64: 8, 256>}, {pipeline_mode = #tpu.pipeline_mode<synchronous>, transform_indices = @transform_5, window_bounds = array<i64: 32, 8>}, {pipeline_mode = #tpu.pipeline_mode<synchronous>, transform_indices = @transform_6, window_bounds = array<i64: 32, 1>}, {transform_indices = @transform_7, window_bounds = array<i64: 2, 32, 256>}]} {
    %cst = arith.constant 0.000000e+00 : f32
    %0 = vector.broadcast %cst : f32 to vector<8x128xf32>
    %c0 = arith.constant 0 : index
    %c0_0 = arith.constant 0 : index
    %1 = vector.load %arg9[%c0, %c0_0] : memref<8x512xf32, #tpu.memory_space<vmem>>, vector<8x128xf32>
    tpu.vector_store %arg9[%c0, %c0_0], %0 {strides = array<i32>} : memref<8x512xf32, #tpu.memory_space<vmem>>, vector<8x128xf32>,
    %cst_1 = arith.constant 0.000000e+00 : f32
    %2 = vector.broadcast %cst_1 : f32 to vector<8x128xf32>
    %c0_2 = arith.constant 0 : index
    %c384 = arith.constant 384 : index
    %3 = vector.load %arg9[%c0_2, %c384] : memref<8x512xf32, #tpu.memory_space<vmem>>, vector<8x128xf32>
    tpu.vector_store %arg9[%c0_2, %c384], %2 {strides = array<i32>} : memref<8x512xf32, #tpu.memory_space<vmem>>, vector<8x128xf32>,
    %c0_3 = arith.constant 0 : index
    %c0_4 = arith.constant 0 : index
    %4 = vector.load %arg2[%c0_3, %c0_4] : memref<8x32xbf16, #tpu.memory_space<vmem>>, vector<8x32xbf16>
    %c0_5 = arith.constant 0 : index
    %c0_6 = arith.constant 0 : index
    %5 = vector.load %arg3[%c0_5, %c0_6] : memref<8x1xf32, #tpu.memory_space<vmem>>, vector<8x1xf32>
    %c0_7 = arith.constant 0 : index
    %c0_8 = arith.constant 0 : index
    %6 = vector.load %arg4[%c0_7, %c0_8] : memref<8x9xf32, #tpu.memory_space<vmem>>, vector<8x9xf32>
    %c0_9 = arith.constant 0 : index
    %c0_10 = arith.constant 0 : index
    %7 = vector.load %arg5[%c0_9, %c0_10] : memref<8x256xf32, #tpu.memory_space<vmem>>, vector<8x256xf32>
    %c0_11 = arith.constant 0 : index
    %c0_12 = arith.constant 0 : index
    %8 = vector.load %arg6[%c0_11, %c0_12] : memref<32x8xbf16, #tpu.memory_space<vmem>>, vector<32x8xbf16>
    %c0_13 = arith.constant 0 : index
    %c0_14 = arith.constant 0 : index
    %9 = vector.load %arg7[%c0_13, %c0_14] : memref<32x1xf32, #tpu.memory_space<vmem>>, vector<32x1xf32>
    %10 = vector.extract_strided_slice %7 {offsets = [0, 0], sizes = [1, 256], strides = [1, 1]} : vector<8x256xf32> to vector<1x256xf32>
    %11 = vector.extract_strided_slice %7 {offsets = [3, 0], sizes = [1, 256], strides = [1, 1]} : vector<8x256xf32> to vector<1x256xf32>
    %12 = arith.mulf %10, %11 : vector<1x256xf32>
    %13 = vector.extract_strided_slice %7 {offsets = [0, 0], sizes = [1, 256], strides = [1, 1]} : vector<8x256xf32> to vector<1x256xf32>
    %14 = vector.extract_strided_slice %7 {offsets = [4, 0], sizes = [1, 256], strides = [1, 1]} : vector<8x256xf32> to vector<1x256xf32>
    %15 = arith.mulf %13, %14 : vector<1x256xf32>
    %16 = vector.extract_strided_slice %7 {offsets = [0, 0], sizes = [1, 256], strides = [1, 1]} : vector<8x256xf32> to vector<1x256xf32>
    %17 = vector.extract_strided_slice %7 {offsets = [5, 0], sizes = [1, 256], strides = [1, 1]} : vector<8x256xf32> to vector<1x256xf32>
    %18 = arith.mulf %16, %17 : vector<1x256xf32>
    %19 = vector.extract_strided_slice %7 {offsets = [1, 0], sizes = [1, 256], strides = [1, 1]} : vector<8x256xf32> to vector<1x256xf32>
    %20 = vector.extract_strided_slice %7 {offsets = [3, 0], sizes = [1, 256], strides = [1, 1]} : vector<8x256xf32> to vector<1x256xf32>
    %21 = arith.mulf %19, %20 : vector<1x256xf32>
    %22 = vector.extract_strided_slice %7 {offsets = [1, 0], sizes = [1, 256], strides = [1, 1]} : vector<8x256xf32> to vector<1x256xf32>
    %23 = vector.extract_strided_slice %7 {offsets = [5, 0], sizes = [1, 256], strides = [1, 1]} : vector<8x256xf32> to vector<1x256xf32>
    %24 = arith.mulf %22, %23 : vector<1x256xf32>
    %25 = vector.extract_strided_slice %7 {offsets = [2, 0], sizes = [1, 256], strides = [1, 1]} : vector<8x256xf32> to vector<1x256xf32>
    %26 = vector.extract_strided_slice %7 {offsets = [3, 0], sizes = [1, 256], strides = [1, 1]} : vector<8x256xf32> to vector<1x256xf32>
    %27 = arith.mulf %25, %26 : vector<1x256xf32>
    %28 = vector.extract_strided_slice %7 {offsets = [2, 0], sizes = [1, 256], strides = [1, 1]} : vector<8x256xf32> to vector<1x256xf32>
    %29 = vector.extract_strided_slice %7 {offsets = [4, 0], sizes = [1, 256], strides = [1, 1]} : vector<8x256xf32> to vector<1x256xf32>
    %30 = arith.mulf %28, %29 : vector<1x256xf32>
    %31 = vector.extract_strided_slice %7 {offsets = [2, 0], sizes = [1, 256], strides = [1, 1]} : vector<8x256xf32> to vector<1x256xf32>
    %32 = vector.extract_strided_slice %7 {offsets = [5, 0], sizes = [1, 256], strides = [1, 1]} : vector<8x256xf32> to vector<1x256xf32>
    %33 = arith.mulf %31, %32 : vector<1x256xf32>
    %c0_15 = arith.constant 0 : index
    %c0_16 = arith.constant 0 : index
    %c0_17 = arith.constant 0 : index
    %34 = vector.load %arg1[%c0_15, %c0_16, %c0_17] : memref<2x32x256xf32, #tpu.memory_space<vmem>>, vector<1x32x256xf32>
    %35 = vector.shape_cast %34 : vector<1x32x256xf32> to vector<32x256xf32>
    %36 = arith.truncf %35 : vector<32x256xf32> to vector<32x256xbf16>
    %cst_18 = arith.constant dense<0.000000e+00> : vector<8x256xf32>
    %37 = tpu.matmul %4, %36, %cst_18 {dimension_numbers = #tpu.dot_dimension_numbers<[1], [0], [0], [1], [0, 0, 1, 1], [], []>} : vector<8x32xbf16>, vector<32x256xbf16>, vector<8x256xf32> -> vector<8x256xf32>
    %38 = vector.broadcast %5 : vector<8x1xf32> to vector<8x256xf32>
    %39 = arith.addf %37, %38 : vector<8x256xf32>
    %cst_19 = arith.constant 0.000000e+00 : f32
    %40 = vector.broadcast %cst_19 : f32 to vector<8x256xf32>
    %41 = arith.maximumf %39, %40 : vector<8x256xf32>
    %c0_20 = arith.constant 0 : index
    %c128 = arith.constant 128 : index
    %42 = vector.load %arg9[%c0_20, %c128] : memref<8x512xf32, #tpu.memory_space<vmem>>, vector<8x256xf32>
    tpu.vector_store %arg9[%c0_20, %c128], %41 {strides = array<i32>} : memref<8x512xf32, #tpu.memory_space<vmem>>, vector<8x256xf32>,
    %cst_21 = arith.constant 0.000000e+00 : f32
    %43 = vector.broadcast %cst_21 : f32 to vector<8x256xf32>
    %c0_22 = arith.constant 0 : index
    %c111 = arith.constant 111 : index
    %44 = vector.load %arg9[%c0_22, %c111] : memref<8x512xf32, #tpu.memory_space<vmem>>, vector<8x256xf32>
    %45 = vector.broadcast %12 : vector<1x256xf32> to vector<8x256xf32>
    %46 = arith.mulf %44, %45 : vector<8x256xf32>
    %47 = vector.extract_strided_slice %6 {offsets = [0, 0], sizes = [8, 1], strides = [1, 1]} : vector<8x9xf32> to vector<8x1xf32>
    %48 = vector.broadcast %47 : vector<8x1xf32> to vector<8x256xf32>
    %49 = arith.mulf %46, %48 : vector<8x256xf32>
    %50 = arith.addf %43, %49 : vector<8x256xf32>
    %c0_23 = arith.constant 0 : index
    %c112 = arith.constant 112 : index
    %51 = vector.load %arg9[%c0_23, %c112] : memref<8x512xf32, #tpu.memory_space<vmem>>, vector<8x256xf32>
    %52 = vector.broadcast %15 : vector<1x256xf32> to vector<8x256xf32>
    %53 = arith.mulf %51, %52 : vector<8x256xf32>
    %54 = vector.extract_strided_slice %6 {offsets = [0, 1], sizes = [8, 1], strides = [1, 1]} : vector<8x9xf32> to vector<8x1xf32>
    %55 = vector.broadcast %54 : vector<8x1xf32> to vector<8x256xf32>
    %56 = arith.mulf %53, %55 : vector<8x256xf32>
    %57 = arith.addf %50, %56 : vector<8x256xf32>
    %c0_24 = arith.constant 0 : index
    %c113 = arith.constant 113 : index
    %58 = vector.load %arg9[%c0_24, %c113] : memref<8x512xf32, #tpu.memory_space<vmem>>, vector<8x256xf32>
    %59 = vector.broadcast %18 : vector<1x256xf32> to vector<8x256xf32>
    %60 = arith.mulf %58, %59 : vector<8x256xf32>
    %61 = vector.extract_strided_slice %6 {offsets = [0, 2], sizes = [8, 1], strides = [1, 1]} : vector<8x9xf32> to vector<8x1xf32>
    %62 = vector.broadcast %61 : vector<8x1xf32> to vector<8x256xf32>
    %63 = arith.mulf %60, %62 : vector<8x256xf32>
    %64 = arith.addf %57, %63 : vector<8x256xf32>
    %c0_25 = arith.constant 0 : index
    %c127 = arith.constant 127 : index
    %65 = vector.load %arg9[%c0_25, %c127] : memref<8x512xf32, #tpu.memory_space<vmem>>, vector<8x256xf32>
    %66 = vector.broadcast %21 : vector<1x256xf32> to vector<8x256xf32>
    %67 = arith.mulf %65, %66 : vector<8x256xf32>
    %68 = vector.extract_strided_slice %6 {offsets = [0, 3], sizes = [8, 1], strides = [1, 1]} : vector<8x9xf32> to vector<8x1xf32>
    %69 = vector.broadcast %68 : vector<8x1xf32> to vector<8x256xf32>
    %70 = arith.mulf %67, %69 : vector<8x256xf32>
    %71 = arith.addf %64, %70 : vector<8x256xf32>
    %c0_26 = arith.constant 0 : index
    %c128_27 = arith.constant 128 : index
    %72 = vector.load %arg9[%c0_26, %c128_27] : memref<8x512xf32, #tpu.memory_space<vmem>>, vector<8x256xf32>
    %73 = vector.extract_strided_slice %6 {offsets = [0, 4], sizes = [8, 1], strides = [1, 1]} : vector<8x9xf32> to vector<8x1xf32>
    %74 = vector.broadcast %73 : vector<8x1xf32> to vector<8x256xf32>
    %75 = arith.mulf %72, %74 : vector<8x256xf32>
    %76 = arith.addf %71, %75 : vector<8x256xf32>
    %c0_28 = arith.constant 0 : index
    %c129 = arith.constant 129 : index
    %77 = vector.load %arg9[%c0_28, %c129] : memref<8x512xf32, #tpu.memory_space<vmem>>, vector<8x256xf32>
    %78 = vector.broadcast %24 : vector<1x256xf32> to vector<8x256xf32>
    %79 = arith.mulf %77, %78 : vector<8x256xf32>
    %80 = vector.extract_strided_slice %6 {offsets = [0, 5], sizes = [8, 1], strides = [1, 1]} : vector<8x9xf32> to vector<8x1xf32>
    %81 = vector.broadcast %80 : vector<8x1xf32> to vector<8x256xf32>
    %82 = arith.mulf %79, %81 : vector<8x256xf32>
    %83 = arith.addf %76, %82 : vector<8x256xf32>
    %c0_29 = arith.constant 0 : index
    %c143 = arith.constant 143 : index
    %84 = vector.load %arg9[%c0_29, %c143] : memref<8x512xf32, #tpu.memory_space<vmem>>, vector<8x256xf32>
    %85 = vector.broadcast %27 : vector<1x256xf32> to vector<8x256xf32>
    %86 = arith.mulf %84, %85 : vector<8x256xf32>
    %87 = vector.extract_strided_slice %6 {offsets = [0, 6], sizes = [8, 1], strides = [1, 1]} : vector<8x9xf32> to vector<8x1xf32>
    %88 = vector.broadcast %87 : vector<8x1xf32> to vector<8x256xf32>
    %89 = arith.mulf %86, %88 : vector<8x256xf32>
    %90 = arith.addf %83, %89 : vector<8x256xf32>
    %c0_30 = arith.constant 0 : index
    %c144 = arith.constant 144 : index
    %91 = vector.load %arg9[%c0_30, %c144] : memref<8x512xf32, #tpu.memory_space<vmem>>, vector<8x256xf32>
    %92 = vector.broadcast %30 : vector<1x256xf32> to vector<8x256xf32>
    %93 = arith.mulf %91, %92 : vector<8x256xf32>
    %94 = vector.extract_strided_slice %6 {offsets = [0, 7], sizes = [8, 1], strides = [1, 1]} : vector<8x9xf32> to vector<8x1xf32>
    %95 = vector.broadcast %94 : vector<8x1xf32> to vector<8x256xf32>
    %96 = arith.mulf %93, %95 : vector<8x256xf32>
    %97 = arith.addf %90, %96 : vector<8x256xf32>
    %c0_31 = arith.constant 0 : index
    %c145 = arith.constant 145 : index
    %98 = vector.load %arg9[%c0_31, %c145] : memref<8x512xf32, #tpu.memory_space<vmem>>, vector<8x256xf32>
    %99 = vector.broadcast %33 : vector<1x256xf32> to vector<8x256xf32>
    %100 = arith.mulf %98, %99 : vector<8x256xf32>
    %101 = vector.extract_strided_slice %6 {offsets = [0, 8], sizes = [8, 1], strides = [1, 1]} : vector<8x9xf32> to vector<8x1xf32>
    %102 = vector.broadcast %101 : vector<8x1xf32> to vector<8x256xf32>
    %103 = arith.mulf %100, %102 : vector<8x256xf32>
    %104 = arith.addf %97, %103 : vector<8x256xf32>
    %105 = arith.truncf %104 : vector<8x256xf32> to vector<8x256xbf16>
    %cst_32 = arith.constant dense<0.000000e+00> : vector<32x256xf32>
    %106 = tpu.matmul %8, %105, %cst_32 {dimension_numbers = #tpu.dot_dimension_numbers<[1], [0], [0], [1], [0, 0, 1, 1], [], []>} : vector<32x8xbf16>, vector<8x256xbf16>, vector<32x256xf32> -> vector<32x256xf32>
    %107 = vector.broadcast %9 : vector<32x1xf32> to vector<32x256xf32>
    %108 = arith.addf %106, %107 : vector<32x256xf32>
    %109 = arith.addf %108, %35 : vector<32x256xf32>
    %cst_33 = arith.constant 0.000000e+00 : f32
    %110 = vector.broadcast %cst_33 : f32 to vector<32x256xf32>
    %111 = arith.maximumf %109, %110 : vector<32x256xf32>
    %c0_34 = arith.constant 0 : index
    %c0_35 = arith.constant 0 : index
    %c0_36 = arith.constant 0 : index
    %112 = vector.load %arg8[%c0_34, %c0_35, %c0_36] : memref<2x32x256xf32, #tpu.memory_space<vmem>>, vector<1x32x256xf32>
    %113 = vector.shape_cast %112 : vector<1x32x256xf32> to vector<32x256xf32>
    %114 = vector.shape_cast %111 : vector<32x256xf32> to vector<1x32x256xf32>
    tpu.vector_store %arg8[%c0_34, %c0_35, %c0_36], %114 {strides = array<i32>} : memref<2x32x256xf32, #tpu.memory_space<vmem>>, vector<1x32x256xf32>,
    %c1 = arith.constant 1 : index
    %c0_37 = arith.constant 0 : index
    %c0_38 = arith.constant 0 : index
    %115 = vector.load %arg1[%c1, %c0_37, %c0_38] : memref<2x32x256xf32, #tpu.memory_space<vmem>>, vector<1x32x256xf32>
    %116 = vector.shape_cast %115 : vector<1x32x256xf32> to vector<32x256xf32>
    %117 = arith.truncf %116 : vector<32x256xf32> to vector<32x256xbf16>
    %cst_39 = arith.constant dense<0.000000e+00> : vector<8x256xf32>
    %118 = tpu.matmul %4, %117, %cst_39 {dimension_numbers = #tpu.dot_dimension_numbers<[1], [0], [0], [1], [0, 0, 1, 1], [], []>} : vector<8x32xbf16>, vector<32x256xbf16>, vector<8x256xf32> -> vector<8x256xf32>
    %119 = vector.broadcast %5 : vector<8x1xf32> to vector<8x256xf32>
    %120 = arith.addf %118, %119 : vector<8x256xf32>
    %cst_40 = arith.constant 0.000000e+00 : f32
    %121 = vector.broadcast %cst_40 : f32 to vector<8x256xf32>
    %122 = arith.maximumf %120, %121 : vector<8x256xf32>
    %c0_41 = arith.constant 0 : index
    %c128_42 = arith.constant 128 : index
    %123 = vector.load %arg9[%c0_41, %c128_42] : memref<8x512xf32, #tpu.memory_space<vmem>>, vector<8x256xf32>
    tpu.vector_store %arg9[%c0_41, %c128_42], %122 {strides = array<i32>} : memref<8x512xf32, #tpu.memory_space<vmem>>, vector<8x256xf32>,
    %cst_43 = arith.constant 0.000000e+00 : f32
    %124 = vector.broadcast %cst_43 : f32 to vector<8x256xf32>
    %c0_44 = arith.constant 0 : index
    %c111_45 = arith.constant 111 : index
    %125 = vector.load %arg9[%c0_44, %c111_45] : memref<8x512xf32, #tpu.memory_space<vmem>>, vector<8x256xf32>
    %126 = vector.broadcast %12 : vector<1x256xf32> to vector<8x256xf32>
    %127 = arith.mulf %125, %126 : vector<8x256xf32>
    %128 = vector.extract_strided_slice %6 {offsets = [0, 0], sizes = [8, 1], strides = [1, 1]} : vector<8x9xf32> to vector<8x1xf32>
    %129 = vector.broadcast %128 : vector<8x1xf32> to vector<8x256xf32>
    %130 = arith.mulf %127, %129 : vector<8x256xf32>
    %131 = arith.addf %124, %130 : vector<8x256xf32>
    %c0_46 = arith.constant 0 : index
    %c112_47 = arith.constant 112 : index
    %132 = vector.load %arg9[%c0_46, %c112_47] : memref<8x512xf32, #tpu.memory_space<vmem>>, vector<8x256xf32>
    %133 = vector.broadcast %15 : vector<1x256xf32> to vector<8x256xf32>
    %134 = arith.mulf %132, %133 : vector<8x256xf32>
    %135 = vector.extract_strided_slice %6 {offsets = [0, 1], sizes = [8, 1], strides = [1, 1]} : vector<8x9xf32> to vector<8x1xf32>
    %136 = vector.broadcast %135 : vector<8x1xf32> to vector<8x256xf32>
    %137 = arith.mulf %134, %136 : vector<8x256xf32>
    %138 = arith.addf %131, %137 : vector<8x256xf32>
    %c0_48 = arith.constant 0 : index
    %c113_49 = arith.constant 113 : index
    %139 = vector.load %arg9[%c0_48, %c113_49] : memref<8x512xf32, #tpu.memory_space<vmem>>, vector<8x256xf32>
    %140 = vector.broadcast %18 : vector<1x256xf32> to vector<8x256xf32>
    %141 = arith.mulf %139, %140 : vector<8x256xf32>
    %142 = vector.extract_strided_slice %6 {offsets = [0, 2], sizes = [8, 1], strides = [1, 1]} : vector<8x9xf32> to vector<8x1xf32>
    %143 = vector.broadcast %142 : vector<8x1xf32> to vector<8x256xf32>
    %144 = arith.mulf %141, %143 : vector<8x256xf32>
    %145 = arith.addf %138, %144 : vector<8x256xf32>
    %c0_50 = arith.constant 0 : index
    %c127_51 = arith.constant 127 : index
    %146 = vector.load %arg9[%c0_50, %c127_51] : memref<8x512xf32, #tpu.memory_space<vmem>>, vector<8x256xf32>
    %147 = vector.broadcast %21 : vector<1x256xf32> to vector<8x256xf32>
    %148 = arith.mulf %146, %147 : vector<8x256xf32>
    %149 = vector.extract_strided_slice %6 {offsets = [0, 3], sizes = [8, 1], strides = [1, 1]} : vector<8x9xf32> to vector<8x1xf32>
    %150 = vector.broadcast %149 : vector<8x1xf32> to vector<8x256xf32>
    %151 = arith.mulf %148, %150 : vector<8x256xf32>
    %152 = arith.addf %145, %151 : vector<8x256xf32>
    %c0_52 = arith.constant 0 : index
    %c128_53 = arith.constant 128 : index
    %153 = vector.load %arg9[%c0_52, %c128_53] : memref<8x512xf32, #tpu.memory_space<vmem>>, vector<8x256xf32>
    %154 = vector.extract_strided_slice %6 {offsets = [0, 4], sizes = [8, 1], strides = [1, 1]} : vector<8x9xf32> to vector<8x1xf32>
    %155 = vector.broadcast %154 : vector<8x1xf32> to vector<8x256xf32>
    %156 = arith.mulf %153, %155 : vector<8x256xf32>
    %157 = arith.addf %152, %156 : vector<8x256xf32>
    %c0_54 = arith.constant 0 : index
    %c129_55 = arith.constant 129 : index
    %158 = vector.load %arg9[%c0_54, %c129_55] : memref<8x512xf32, #tpu.memory_space<vmem>>, vector<8x256xf32>
    %159 = vector.broadcast %24 : vector<1x256xf32> to vector<8x256xf32>
    %160 = arith.mulf %158, %159 : vector<8x256xf32>
    %161 = vector.extract_strided_slice %6 {offsets = [0, 5], sizes = [8, 1], strides = [1, 1]} : vector<8x9xf32> to vector<8x1xf32>
    %162 = vector.broadcast %161 : vector<8x1xf32> to vector<8x256xf32>
    %163 = arith.mulf %160, %162 : vector<8x256xf32>
    %164 = arith.addf %157, %163 : vector<8x256xf32>
    %c0_56 = arith.constant 0 : index
    %c143_57 = arith.constant 143 : index
    %165 = vector.load %arg9[%c0_56, %c143_57] : memref<8x512xf32, #tpu.memory_space<vmem>>, vector<8x256xf32>
    %166 = vector.broadcast %27 : vector<1x256xf32> to vector<8x256xf32>
    %167 = arith.mulf %165, %166 : vector<8x256xf32>
    %168 = vector.extract_strided_slice %6 {offsets = [0, 6], sizes = [8, 1], strides = [1, 1]} : vector<8x9xf32> to vector<8x1xf32>
    %169 = vector.broadcast %168 : vector<8x1xf32> to vector<8x256xf32>
    %170 = arith.mulf %167, %169 : vector<8x256xf32>
    %171 = arith.addf %164, %170 : vector<8x256xf32>
    %c0_58 = arith.constant 0 : index
    %c144_59 = arith.constant 144 : index
    %172 = vector.load %arg9[%c0_58, %c144_59] : memref<8x512xf32, #tpu.memory_space<vmem>>, vector<8x256xf32>
    %173 = vector.broadcast %30 : vector<1x256xf32> to vector<8x256xf32>
    %174 = arith.mulf %172, %173 : vector<8x256xf32>
    %175 = vector.extract_strided_slice %6 {offsets = [0, 7], sizes = [8, 1], strides = [1, 1]} : vector<8x9xf32> to vector<8x1xf32>
    %176 = vector.broadcast %175 : vector<8x1xf32> to vector<8x256xf32>
    %177 = arith.mulf %174, %176 : vector<8x256xf32>
    %178 = arith.addf %171, %177 : vector<8x256xf32>
    %c0_60 = arith.constant 0 : index
    %c145_61 = arith.constant 145 : index
    %179 = vector.load %arg9[%c0_60, %c145_61] : memref<8x512xf32, #tpu.memory_space<vmem>>, vector<8x256xf32>
    %180 = vector.broadcast %33 : vector<1x256xf32> to vector<8x256xf32>
    %181 = arith.mulf %179, %180 : vector<8x256xf32>
    %182 = vector.extract_strided_slice %6 {offsets = [0, 8], sizes = [8, 1], strides = [1, 1]} : vector<8x9xf32> to vector<8x1xf32>
    %183 = vector.broadcast %182 : vector<8x1xf32> to vector<8x256xf32>
    %184 = arith.mulf %181, %183 : vector<8x256xf32>
    %185 = arith.addf %178, %184 : vector<8x256xf32>
    %186 = arith.truncf %185 : vector<8x256xf32> to vector<8x256xbf16>
    %cst_62 = arith.constant dense<0.000000e+00> : vector<32x256xf32>
    %187 = tpu.matmul %8, %186, %cst_62 {dimension_numbers = #tpu.dot_dimension_numbers<[1], [0], [0], [1], [0, 0, 1, 1], [], []>} : vector<32x8xbf16>, vector<8x256xbf16>, vector<32x256xf32> -> vector<32x256xf32>
    %188 = vector.broadcast %9 : vector<32x1xf32> to vector<32x256xf32>
    %189 = arith.addf %187, %188 : vector<32x256xf32>
    %190 = arith.addf %189, %116 : vector<32x256xf32>
    %cst_63 = arith.constant 0.000000e+00 : f32
    %191 = vector.broadcast %cst_63 : f32 to vector<32x256xf32>
    %192 = arith.maximumf %190, %191 : vector<32x256xf32>
    %c1_64 = arith.constant 1 : index
    %c0_65 = arith.constant 0 : index
    %c0_66 = arith.constant 0 : index
    %193 = vector.load %arg8[%c1_64, %c0_65, %c0_66] : memref<2x32x256xf32, #tpu.memory_space<vmem>>, vector<1x32x256xf32>
    %194 = vector.shape_cast %193 : vector<1x32x256xf32> to vector<32x256xf32>
    %195 = vector.shape_cast %192 : vector<32x256xf32> to vector<1x32x256xf32>
    tpu.vector_store %arg8[%c1_64, %c0_65, %c0_66], %195 {strides = array<i32>} : memref<2x32x256xf32, #tpu.memory_space<vmem>>, vector<1x32x256xf32>,
    return
  }
  func.func @transform_0(%arg0: i32) -> (i32, i32, i32) {
    %c0_i32 = arith.constant 0 : i32
    %c0_i32_0 = arith.constant 0 : i32
    %c0_i32_1 = arith.constant 0 : i32
    return %arg0, %c0_i32, %c0_i32_0 : i32, i32, i32
  }
  func.func @transform_1(%arg0: i32) -> (i32, i32) {
    %c0_i32 = arith.constant 0 : i32
    %c0_i32_0 = arith.constant 0 : i32
    %c0_i32_1 = arith.constant 0 : i32
    return %c0_i32, %c0_i32_0 : i32, i32
  }
  func.func @transform_2(%arg0: i32) -> (i32, i32) {
    %c0_i32 = arith.constant 0 : i32
    %c0_i32_0 = arith.constant 0 : i32
    %c0_i32_1 = arith.constant 0 : i32
    return %c0_i32, %c0_i32_0 : i32, i32
  }
  func.func @transform_3(%arg0: i32) -> (i32, i32) {
    %c0_i32 = arith.constant 0 : i32
    %c0_i32_0 = arith.constant 0 : i32
    %c0_i32_1 = arith.constant 0 : i32
    return %c0_i32, %c0_i32_0 : i32, i32
  }
  func.func @transform_4(%arg0: i32) -> (i32, i32) {
    %c0_i32 = arith.constant 0 : i32
    %c0_i32_0 = arith.constant 0 : i32
    %c0_i32_1 = arith.constant 0 : i32
    return %c0_i32, %c0_i32_0 : i32, i32
  }
  func.func @transform_5(%arg0: i32) -> (i32, i32) {
    %c0_i32 = arith.constant 0 : i32
    %c0_i32_0 = arith.constant 0 : i32
    %c0_i32_1 = arith.constant 0 : i32
    return %c0_i32, %c0_i32_0 : i32, i32
  }
  func.func @transform_6(%arg0: i32) -> (i32, i32) {
    %c0_i32 = arith.constant 0 : i32
    %c0_i32_0 = arith.constant 0 : i32
    %c0_i32_1 = arith.constant 0 : i32
    return %c0_i32, %c0_i32_0 : i32, i32
  }
  func.func @transform_7(%arg0: i32) -> (i32, i32, i32) {
    %c0_i32 = arith.constant 0 : i32
    %c0_i32_0 = arith.constant 0 : i32
    %c0_i32_1 = arith.constant 0 : i32
    return %arg0, %c0_i32, %c0_i32_0 : i32, i32, i32
  }
}

</mosaic_0001>

<llo_original>
// kernel: shufflenet_unit_pallas.1
$region0: #{shufflenet_unit_pallas.1}
  #allocation0 [shape = 'u32[]', space=smem, size = 0x4, offset = 0x4, fixed_abs, tag = 'smem constant byte address 0x4 - core index']
  #allocation1 [shape = 'u32[144,128]{1,0:T(1,128)}', space=vmem, size = 0x12000, scoped, tag = 'internal scratch']
  #allocation2 [shape = 'f32[8,512]{1,0:T(8,128)}', space=vmem, size = 0x4000, scoped, tag = 'scratch operand']
  %s0 = inlined_call_operand.vmem [shape: f32[4,32,256], index: 0, kind: input, shape index: {}]
  %s1 = inlined_call_operand.vmem [shape: bf16[8,32], index: 1, kind: input, shape index: {}]
  %s2 = inlined_call_operand.vmem [shape: f32[8,1], index: 2, kind: input, shape index: {}]
  %s3 = inlined_call_operand.vmem [shape: f32[8,9], index: 3, kind: input, shape index: {}]
  %s4 = inlined_call_operand.vmem [shape: f32[8,256], index: 4, kind: input, shape index: {}]
  %s5 = inlined_call_operand.vmem [shape: bf16[32,8], index: 5, kind: input, shape index: {}]
  %s6 = inlined_call_operand.vmem [shape: f32[32,1], index: 6, kind: input, shape index: {}]
  %s7 = inlined_call_operand.vmem [shape: f32[4,32,256], index: 7, kind: output, shape index: {}]
  %s8 = sld [smem:[#allocation0]]
  $region61: #{shufflenet_unit_pallas.1} parent=0
    _
  %s10 = ssub.s32 1, %s8
  %s11 = scalar_select 0, %s10, %s8
  loop: start=0, step=1, limit=4
  $region2: #{shufflenet_unit_pallas.1} parent=0 // loop_pre_header
    _
  $region3: #{shufflenet_unit_pallas.1} parent=0 // loop_header
    %s13 = sphi 0, %s17
    %p14 = scmp.ge.s32.totalorder %s13, 4
    %s23 = sphi 0, %s25
    %s26 = sphi 0, %s23
    %s27 = sphi 0, %s26
    %s43 = sphi 0, %s27
    %s47 = sphi 0, %s47
    %s49 = sphi 0, %s47
    %s50 = sphi 0, %s49
    %s64 = sphi 0, %s50
    %s68 = sphi 0, %s68
    %s70 = sphi 0, %s68
    %s71 = sphi 0, %s70
    %s85 = sphi 0, %s71
    %s89 = sphi 0, %s89
    %s91 = sphi 0, %s89
    %s92 = sphi 0, %s91
    %s106 = sphi 0, %s92
    %s110 = sphi 0, %s110
    %s112 = sphi 0, %s110
    %s113 = sphi 0, %s112
    %s127 = sphi 0, %s113
    %s131 = sphi 0, %s131
    %s133 = sphi 0, %s131
    %s134 = sphi 0, %s133
    %s148 = sphi 0, %s134
    %s152 = sphi 0, %s152
    %s154 = sphi 0, %s152
    %s155 = sphi 0, %s154
    %s169 = sphi 0, %s155
    %s175 = sphi 0, %s177
    %s178 = sphi 0, %s175
    %s179 = sphi 0, %s178
    %s195 = sphi 0, %s179
  $region4: #{shufflenet_unit_pallas.1} parent=0 // loop_header_branch
    %16 = sbr.rel (%p14) target = $region8
  $region5: #{shufflenet_unit_pallas.1} parent=0 // loop_body
    %s18 = ssub.s32 %s13, 1
    %s19 = ssub.s32 %s13, 2
    %s20 = sadd.s32 %s13, 1
    %s21 = ssub.s32 %s13, %s20
    %p22 = scmp.eq.s32.totalorder %s21, 0
    %s24 = sadd.s32 %s23, 1
    %s25 = scalar_select %p22, %s23, %s24
    %p28 = pneg %p22
    %p29 = scmp.eq.s32.totalorder %s13, 1
    %p30 = por %p28, %p29
    %p31 = scmp.ne.s32.totalorder %s23, %s26
    %p32 = scmp.eq.s32.totalorder %s13, 0
    %p33 = por %p31, %p32
    %p34 = scmp.ne.s32.totalorder %s23, %s26
    %p35 = scmp.eq.s32.totalorder %s18, 1
    %p36 = por %p34, %p35
    %p37 = scmp.ne.s32.totalorder %s26, %s27
    %p38 = scmp.eq.s32.totalorder %s18, 0
    %p39 = por %p37, %p38
    %p40 = scmp.ne.s32.totalorder %s26, %s27
    %p41 = scmp.eq.s32.totalorder %s19, 1
    %p42 = por %p40, %p41
    %p44 = scmp.ne.s32.totalorder %s27, %s43
    %p45 = scmp.eq.s32.totalorder %s19, 0
    %p46 = por %p44, %p45
    %s48 = sadd.s32 %s47, 1
    %p51 = scmp.eq.s32.totalorder %s13, 1
    %p52 = scmp.ne.s32.totalorder %s47, %s49
    %p53 = scmp.eq.s32.totalorder %s13, 0
    %p54 = por %p52, %p53
    %p55 = scmp.ne.s32.totalorder %s47, %s49
    %p56 = scmp.eq.s32.totalorder %s18, 1
    %p57 = por %p55, %p56
    %p58 = scmp.ne.s32.totalorder %s49, %s50
    %p59 = scmp.eq.s32.totalorder %s18, 0
    %p60 = por %p58, %p59
    %p61 = scmp.ne.s32.totalorder %s49, %s50
    %p62 = scmp.eq.s32.totalorder %s19, 1
    %p63 = por %p61, %p62
    %p65 = scmp.ne.s32.totalorder %s50, %s64
    %p66 = scmp.eq.s32.totalorder %s19, 0
    %p67 = por %p65, %p66
    %s69 = sadd.s32 %s68, 1
    %p72 = scmp.eq.s32.totalorder %s13, 1
    %p73 = scmp.ne.s32.totalorder %s68, %s70
    %p74 = scmp.eq.s32.totalorder %s13, 0
    %p75 = por %p73, %p74
    %p76 = scmp.ne.s32.totalorder %s68, %s70
    %p77 = scmp.eq.s32.totalorder %s18, 1
    %p78 = por %p76, %p77
    %p79 = scmp.ne.s32.totalorder %s70, %s71
    %p80 = scmp.eq.s32.totalorder %s18, 0
    %p81 = por %p79, %p80
    %p82 = scmp.ne.s32.totalorder %s70, %s71
    %p83 = scmp.eq.s32.totalorder %s19, 1
    %p84 = por %p82, %p83
    %p86 = scmp.ne.s32.totalorder %s71, %s85
    %p87 = scmp.eq.s32.totalorder %s19, 0
    %p88 = por %p86, %p87
    %s90 = sadd.s32 %s89, 1
    %p93 = scmp.eq.s32.totalorder %s13, 1
    %p94 = scmp.ne.s32.totalorder %s89, %s91
    %p95 = scmp.eq.s32.totalorder %s13, 0
    %p96 = por %p94, %p95
    %p97 = scmp.ne.s32.totalorder %s89, %s91
    %p98 = scmp.eq.s32.totalorder %s18, 1
    %p99 = por %p97, %p98
    %p100 = scmp.ne.s32.totalorder %s91, %s92
    %p101 = scmp.eq.s32.totalorder %s18, 0
    %p102 = por %p100, %p101
    %p103 = scmp.ne.s32.totalorder %s91, %s92
    %p104 = scmp.eq.s32.totalorder %s19, 1
    %p105 = por %p103, %p104
    %p107 = scmp.ne.s32.totalorder %s92, %s106
    %p108 = scmp.eq.s32.totalorder %s19, 0
    %p109 = por %p107, %p108
    %s111 = sadd.s32 %s110, 1
    %p114 = scmp.eq.s32.totalorder %s13, 1
    %p115 = scmp.ne.s32.totalorder %s110, %s112
    %p116 = scmp.eq.s32.totalorder %s13, 0
    %p117 = por %p115, %p116
    %p118 = scmp.ne.s32.totalorder %s110, %s112
    %p119 = scmp.eq.s32.totalorder %s18, 1
    %p120 = por %p118, %p119
    %p121 = scmp.ne.s32.totalorder %s112, %s113
    %p122 = scmp.eq.s32.totalorder %s18, 0
    %p123 = por %p121, %p122
    %p124 = scmp.ne.s32.totalorder %s112, %s113
    %p125 = scmp.eq.s32.totalorder %s19, 1
    %p126 = por %p124, %p125
    %p128 = scmp.ne.s32.totalorder %s113, %s127
    %p129 = scmp.eq.s32.totalorder %s19, 0
    %p130 = por %p128, %p129
    %s132 = sadd.s32 %s131, 1
    %p135 = scmp.eq.s32.totalorder %s13, 1
    %p136 = scmp.ne.s32.totalorder %s131, %s133
    %p137 = scmp.eq.s32.totalorder %s13, 0
    %p138 = por %p136, %p137
    %p139 = scmp.ne.s32.totalorder %s131, %s133
    %p140 = scmp.eq.s32.totalorder %s18, 1
    %p141 = por %p139, %p140
    %p142 = scmp.ne.s32.totalorder %s133, %s134
    %p143 = scmp.eq.s32.totalorder %s18, 0
    %p144 = por %p142, %p143
    %p145 = scmp.ne.s32.totalorder %s133, %s134
    %p146 = scmp.eq.s32.totalorder %s19, 1
    %p147 = por %p145, %p146
    %p149 = scmp.ne.s32.totalorder %s134, %s148
    %p150 = scmp.eq.s32.totalorder %s19, 0
    %p151 = por %p149, %p150
    %s153 = sadd.s32 %s152, 1
    %p156 = scmp.eq.s32.totalorder %s13, 1
    %p157 = scmp.ne.s32.totalorder %s152, %s154
    %p158 = scmp.eq.s32.totalorder %s13, 0
    %p159 = por %p157, %p158
    %p160 = scmp.ne.s32.totalorder %s152, %s154
    %p161 = scmp.eq.s32.totalorder %s18, 1
    %p162 = por %p160, %p161
    %p163 = scmp.ne.s32.totalorder %s154, %s155
    %p164 = scmp.eq.s32.totalorder %s18, 0
    %p165 = por %p163, %p164
    %p166 = scmp.ne.s32.totalorder %s154, %s155
    %p167 = scmp.eq.s32.totalorder %s19, 1
    %p168 = por %p166, %p167
    %p170 = scmp.ne.s32.totalorder %s155, %s169
    %p171 = scmp.eq.s32.totalorder %s19, 0
    %p172 = por %p170, %p171
    %s173 = ssub.s32 %s13, %s20
    %p174 = scmp.eq.s32.totalorder %s173, 0
    %s176 = sadd.s32 %s175, 1
    %s177 = scalar_select %p174, %s175, %s176
    %p180 = pneg %p174
    %p181 = scmp.eq.s32.totalorder %s13, 1
    %p182 = por %p180, %p181
    %p183 = scmp.ne.s32.totalorder %s175, %s178
    %p184 = scmp.eq.s32.totalorder %s13, 0
    %p185 = por %p183, %p184
    %p186 = scmp.ne.s32.totalorder %s175, %s178
    %p187 = scmp.eq.s32.totalorder %s18, 1
    %p188 = por %p186, %p187
    %p189 = scmp.ne.s32.totalorder %s178, %s179
    %p190 = scmp.eq.s32.totalorder %s18, 0
    %p191 = por %p189, %p190
    %p192 = scmp.ne.s32.totalorder %s178, %s179
    %p193 = scmp.eq.s32.totalorder %s19, 1
    %p194 = por %p192, %p193
    %p196 = scmp.ne.s32.totalorder %s179, %s195
    %p197 = scmp.eq.s32.totalorder %s19, 0
    %p198 = por %p196, %p197
    %p199 = scmp.le.s32.totalorder 1, %s13
    %p200 = scmp.lt.s32.totalorder %s13, 3
    %p201 = pnand %p199, %p200
    %p202 = pneg %p201
    // Predicated region
    $region9: #{shufflenet_unit_pallas.1} parent=5 // pred_check
      _
    $region10: #{shufflenet_unit_pallas.1} parent=5 // pred_check_branch
      %204 = sbr.rel (%p201) target = $region12
    $region11: #{shufflenet_unit_pallas.1} parent=5 // pred_region
      %s205 = ssub.s32 %s13, 1
      // Predicated region
      $region13: #{shufflenet_unit_pallas.1} parent=11 // pred_check
        %p206 = pneg %p60
      $region14: #{shufflenet_unit_pallas.1} parent=11 // pred_check_branch
        %208 = sbr.rel (%p206) target = $region16
      $region15: #{shufflenet_unit_pallas.1} parent=11 // pred_region
        _
      $region16: #{shufflenet_unit_pallas.1} parent=11 // pred_fallthru
        _
      // Predicated region
      $region17: #{shufflenet_unit_pallas.1} parent=11 // pred_check
        %p209 = pneg %p81
      $region18: #{shufflenet_unit_pallas.1} parent=11 // pred_check_branch
        %211 = sbr.rel (%p209) target = $region20
      $region19: #{shufflenet_unit_pallas.1} parent=11 // pred_region
        _
      $region20: #{shufflenet_unit_pallas.1} parent=11 // pred_fallthru
        _
      // Predicated region
      $region21: #{shufflenet_unit_pallas.1} parent=11 // pred_check
        %p212 = pneg %p102
      $region22: #{shufflenet_unit_pallas.1} parent=11 // pred_check_branch
        %214 = sbr.rel (%p212) target = $region24
      $region23: #{shufflenet_unit_pallas.1} parent=11 // pred_region
        _
      $region24: #{shufflenet_unit_pallas.1} parent=11 // pred_fallthru
        _
      // Predicated region
      $region25: #{shufflenet_unit_pallas.1} parent=11 // pred_check
        %p215 = pneg %p123
      $region26: #{shufflenet_unit_pallas.1} parent=11 // pred_check_branch
        %217 = sbr.rel (%p215) target = $region28
      $region27: #{shufflenet_unit_pallas.1} parent=11 // pred_region
        _
      $region28: #{shufflenet_unit_pallas.1} parent=11 // pred_fallthru
        _
      // Predicated region
      $region29: #{shufflenet_unit_pallas.1} parent=11 // pred_check
        %p218 = pneg %p144
      $region30: #{shufflenet_unit_pallas.1} parent=11 // pred_check_branch
        %220 = sbr.rel (%p218) target = $region32
      $region31: #{shufflenet_unit_pallas.1} parent=11 // pred_region
        _
      $region32: #{shufflenet_unit_pallas.1} parent=11 // pred_fallthru
        _
      // Predicated region
      $region33: #{shufflenet_unit_pallas.1} parent=11 // pred_check
        %p221 = pneg %p165
      $region34: #{shufflenet_unit_pallas.1} parent=11 // pred_check_branch
        %223 = sbr.rel (%p221) target = $region36
      $region35: #{shufflenet_unit_pallas.1} parent=11 // pred_region
        _
      $region36: #{shufflenet_unit_pallas.1} parent=11 // pred_fallthru
        _
    $region12: #{shufflenet_unit_pallas.1} parent=5 // pred_fallthru
      _
    %p224 = scmp.lt.s32.totalorder %s13, 2
    // Predicated region
    $region37: #{shufflenet_unit_pallas.1} parent=5 // pred_check
      %p225 = pneg %p224
    $region38: #{shufflenet_unit_pallas.1} parent=5 // pred_check_branch
      %227 = sbr.rel (%p225) target = $region40
    $region39: #{shufflenet_unit_pallas.1} parent=5 // pred_region
      // Predicated region
      $region41: #{shufflenet_unit_pallas.1} parent=39 // pred_check
        %p228 = pneg %p33
      $region42: #{shufflenet_unit_pallas.1} parent=39 // pred_check_branch
        %230 = sbr.rel (%p228) target = $region44
      $region43: #{shufflenet_unit_pallas.1} parent=39 // pred_region
        %s231 = smul.u32 2, %s13
        %p232 = scmp.lt.s32.totalorder %s231, 3
        %s233 = scalar_select %p232, %s231, 3
        %s234 = smul.addr %s233, 8
        %s235 = smul.addr %s234, 8
        %s236 = scalar_lea.vmem %s0, %s235
        %s237 = smul.u32 2, %s13
      $region44: #{shufflenet_unit_pallas.1} parent=39 // pred_fallthru
        _
    $region40: #{shufflenet_unit_pallas.1} parent=5 // pred_fallthru
      _
    %p238 = scmp.le.s32.totalorder 1, %s13
    %p239 = scmp.lt.s32.totalorder %s13, 3
    %p240 = pnand %p238, %p239
    %p241 = pneg %p240
    // Predicated region
    $region45: #{shufflenet_unit_pallas.1} parent=5 // pred_check
      _
    $region46: #{shufflenet_unit_pallas.1} parent=5 // pred_check_branch
      %243 = sbr.rel (%p240) target = $region48
    $region47: #{shufflenet_unit_pallas.1} parent=5 // pred_region
      %s244 = ssub.s32 %s13, 1
      %s245 = smul.u32 2, %s18
      %p246 = scmp.lt.s32.totalorder %s245, 3
      %s247 = scalar_select %p246, %s245, 3
      %s248 = smul.addr %s247, 8
      %s249 = smul.addr %s248, 8
      %s250 = scalar_lea.vmem %s0, %s249
      %p251 = pneg %p39
      %p252 = pneg %p36
      %p253 = pneg %p60
      %p254 = pneg %p57
      %p255 = pneg %p81
      %p256 = pneg %p78
      %p257 = pneg %p102
      %p258 = pneg %p99
      %p259 = pneg %p123
      %p260 = pneg %p120
      %p261 = pneg %p144
      %p262 = pneg %p141
      %p263 = pneg %p165
      %p264 = pneg %p162
      %p265 = pneg %p191
      %p266 = pneg %p188
      %s267 = smul.u32 2, %s18
      %p268 = scmp.lt.s32.totalorder %s267, 3
      %s269 = scalar_select %p268, %s267, 3
      %s270 = smul.addr %s269, 8
      %s271 = smul.addr %s270, 8
      %s272 = scalar_lea.vmem %s7, %s271
      %s273 = smul.u32 2, %s18
      %p274 = scmp.lt.s32.totalorder %s273, 3
      %s275 = scalar_select %p274, %s273, 3
      %s276 = smul.addr %s275, 8
      %s277 = smul.addr %s276, 8
      %s278 = scalar_lea.vmem %s0, %s277
      %s279 = smul.u32 2, %s18
      %s280 = smul.u32 2, %s18
      %p281 = scmp.lt.s32.totalorder %s280, 3
      %s282 = scalar_select %p281, %s280, 3
      %s283 = smul.addr %s282, 8
      %s284 = smul.addr %s283, 8
      %s285 = scalar_lea.vmem %s7, %s284
      %s286 = smul.u32 2, %s18
      %288 = vst [vmem:[#allocation2] sm:$0xff] 0.0
      %289 = vst [vmem:[#allocation2 + $0x18] sm:$0xff] 0.0
      %v290 = vld [vmem:[%s1] sm:$0xf]
      %v291 = vld [vmem:[%s2] sm:$0xff]
      %v292 = vld [vmem:[%s3] sm:$0xff]
      %v293 = vld [vmem:[%s4] sm:$0xff]
      %v294 = vld [vmem:[%s4 + $0x8] sm:$0xff]
      %v295 = vld [vmem:[%s5] sm:$0xf]
      %v296 = vld [vmem:[%s5 + $0x4] sm:$0xf]
      %v297 = vld [vmem:[%s5 + $0x8] sm:$0xf]
      %v298 = vld [vmem:[%s5 + $0xc] sm:$0xf]
      %v299 = vld [vmem:[%s6] sm:$0xff]
      %v300 = vld [vmem:[%s6 + $0x8] sm:$0xff]
      %v301 = vld [vmem:[%s6 + $0x10] sm:$0xff]
      %v302 = vld [vmem:[%s6 + $0x18] sm:$0xff]
      %v305 = vrot.slane %v293, 3
      %v306 = vrot.slane %v294, 3
      %v309 = vmul.f32 %v293, %v305
      %v310 = vmul.f32 %v294, %v306
      %v311 = vrot.slane %v293, 4
      %v312 = vrot.slane %v294, 4
      %v315 = vmul.f32 %v293, %v311
      %v316 = vmul.f32 %v294, %v312
      %v317 = vrot.slane %v293, 5
      %v318 = vrot.slane %v294, 5
      %v321 = vmul.f32 %v293, %v317
      %v322 = vmul.f32 %v294, %v318
      %v323 = vrot.slane %v293, 2
      %v324 = vrot.slane %v294, 2
      %v327 = vmul.f32 %v293, %v323
      %v328 = vmul.f32 %v294, %v324
      %v329 = vrot.slane %v293, 1
      %v330 = vrot.slane %v294, 1
      %v333 = vmul.f32 %v293, %v329
      %v334 = vmul.f32 %v294, %v330
      %v335 = vld [vmem:[%s278] sm:$0xff]
      %v336 = vld [vmem:[%s278 + $0x8] sm:$0xff]
      %v337 = vld [vmem:[%s278 + $0x10] sm:$0xff]
      %v338 = vld [vmem:[%s278 + $0x18] sm:$0xff]
      %v339 = vld [vmem:[%s278 + $0x20] sm:$0xff]
      %v340 = vld [vmem:[%s278 + $0x28] sm:$0xff]
      %v341 = vld [vmem:[%s278 + $0x30] sm:$0xff]
      %v342 = vld [vmem:[%s278 + $0x38] sm:$0xff]
      %v343 = vpack.c.bf16 %v337, %v335
      %v344 = vpack.c.bf16 %v338, %v336
      %v345 = vpack.c.bf16 %v341, %v339
      %v346 = vpack.c.bf16 %v342, %v340
      %348 = vset.pattern.permute.xlu0 0
      %349 = vperm.xlu0 %348, %v291
      %v350 = vpop.permute.xlu0 %349
      %vm352 = vcmask 261120
      %v354 = vsel %vm352, %v290, 0
      %356 = vmatprep.subr.bf16.mxu0 0
      %357 = vmatpush1.bf16.msra.mxu0 0
      %358 = vmatprep.subr.bf16.mxu0 0
      %359 = vmatpush1.bf16.msra.mxu0 0
      %360 = vmatprep.subr.bf16.mxu0 0
      %361 = vmatpush1.bf16.msra.mxu0 0
      %362 = vmatprep.subr.bf16.mxu0 0
      %363 = vmatpush1.bf16.msra.mxu0 0
      %364 = vmatprep.subr.bf16.mxu0 0
      %365 = vmatpush1.bf16.msra.mxu0 0
      %366 = vmatprep.subr.bf16.mxu0 0
      %367 = vmatpush1.bf16.msra.mxu0 0
      %368 = vmatprep.subr.bf16.mxu0 %v346
      %369 = vmatpush1.bf16.msra.mxu0 %v345
      %370 = vmatprep.subr.bf16.mxu0 %v344
      %371 = vmatpush1.bf16.msra.mxu0 %v343
      %372 = vmatprep.subr.bf16.mxu0 0
      %373 = vmatpush2.bf16.msra.mxu0 0
      %374 = vmatprep.subr.bf16.mxu0 0
      %375 = vmatpush2.bf16.msra.mxu0 0
      %376 = vmatprep.subr.bf16.mxu0 0
      %377 = vmatpush2.bf16.msra.mxu0 0
      %378 = vmatprep.subr.bf16.mxu0 0
      %379 = vmatpush2.bf16.msra.mxu0 0
      %380 = vmatprep.subr.bf16.mxu0 0
      %381 = vmatpush2.bf16.msra.mxu0 0
      %382 = vmatprep.subr.bf16.mxu0 0
      %383 = vmatpush2.bf16.msra.mxu0 0
      %384 = vmatprep.subr.bf16.mxu0 0
      %385 = vmatpush2.bf16.msra.mxu0 0
      %386 = vmatprep.subr.bf16.mxu0 0
      %387 = vmatpush2.bf16.msra.mxu0 0
      %388 = vmatprep.mubr.bf16.mxu0 0
      %389 = vmatmul.mubr.bf16.gmra.mxu0 %v354
      %v390 = vpop.f32.mrf.mxu0
      %v391 = vadd.f32 %v350, %v390
      %v392 = vpop.f32.mrf.mxu0
      %v393 = vadd.f32 %v350, %v392
      %v394 = vpop.f32.mrf.mxu0
      %v395 = vpop.f32.mrf.mxu0
      %396 = vdwg.mxu0
      %v397 = vmax.f32 %v391, 0.0
      %v398 = vmax.f32 %v393, 0.0
      %399 = vst [vmem:[#allocation2 + $0x8] sm:$0xff] %v397
      %400 = vst [vmem:[#allocation2 + $0x10] sm:$0xff] %v398
      %v401 = vld [vmem:[#allocation2] sm:$0xff]
      %v402 = vld [vmem:[#allocation2 + $0x8] sm:$0xff]
      %v403 = vld [vmem:[#allocation2 + $0x10] sm:$0xff]
      %v404 = vlaneseq
      %v405 = vshrl.u32 %v404, 7
      %v406 = vsub.s32 0, %v405
      %v407 = vrot.slane %v309, %v406
      %v408 = vlaneseq
      %v409 = vshrl.u32 %v408, 7
      %v410 = vsub.s32 0, %v409
      %v411 = vrot.slane %v310, %v410
      %414 = vrot.lane.b32.xlu0 %v407, 111
      %v415 = vpop.permute.xlu0 %414
      %416 = vrot.lane.b32.xlu0 %v411, 111
      %v417 = vpop.permute.xlu0 %416
      %vm418 = vcmask 908288
      %v419 = vsel %vm418, %v415, %v417
      %v423 = vmul.f32 %v401, %v415
      %v424 = vmul.f32 %v402, %v419
      %v425 = vmul.f32 %v403, %v417
      %427 = vset.pattern.permute.xlu0 0
      %428 = vperm.xlu0 %427, %v292
      %v429 = vpop.permute.xlu0 %428
      %v431 = vmul.f32 %v423, %v429
      %v432 = vmul.f32 %v424, %v429
      %v433 = vmul.f32 %v425, %v429
      %v434 = vadd.f32 %v431, 0.0
      %v435 = vadd.f32 %v432, 0.0
      %v436 = vadd.f32 %v433, 0.0
      %v437 = vlaneseq
      %v438 = vshrl.u32 %v437, 7
      %v439 = vsub.s32 0, %v438
      %v440 = vrot.slane %v315, %v439
      %v441 = vlaneseq
      %v442 = vshrl.u32 %v441, 7
      %v443 = vsub.s32 0, %v442
      %v444 = vrot.slane %v316, %v443
      %447 = vrot.lane.b32.xlu0 %v440, 112
      %v448 = vpop.permute.xlu0 %447
      %449 = vrot.lane.b32.xlu0 %v444, 112
      %v450 = vpop.permute.xlu0 %449
      %vm451 = vcmask 916480
      %v452 = vsel %vm451, %v448, %v450
      %v456 = vmul.f32 %v401, %v448
      %v457 = vmul.f32 %v402, %v452
      %v458 = vmul.f32 %v403, %v450
      %459 = vset.pattern.permute.xlu0 1
      %460 = vperm.xlu0 %459, %v292
      %v461 = vpop.permute.xlu0 %460
      %v463 = vmul.f32 %v456, %v461
      %v464 = vmul.f32 %v457, %v461
      %v465 = vmul.f32 %v458, %v461
      %469 = vrot.lane.b32.xlu0 %v463, 127
      %v470 = vpop.permute.xlu0 %469
      %471 = vrot.lane.b32.xlu0 %v464, 127
      %v472 = vpop.permute.xlu0 %471
      %473 = vrot.lane.b32.xlu0 %v465, 127
      %v474 = vpop.permute.xlu0 %473
      %vm475 = vcmask 1039360
      %v476 = vsel %vm475, %v470, %v472
      %v477 = vsel %vm475, %v472, %v474
      %v481 = vadd.f32 %v434, %v476
      %v482 = vadd.f32 %v435, %v477
      %v483 = vadd.f32 %v436, %v474
      %v484 = vlaneseq
      %v485 = vshrl.u32 %v484, 7
      %v486 = vsub.s32 0, %v485
      %v487 = vrot.slane %v321, %v486
      %v488 = vlaneseq
      %v489 = vshrl.u32 %v488, 7
      %v490 = vsub.s32 0, %v489
      %v491 = vrot.slane %v322, %v490
      %494 = vrot.lane.b32.xlu0 %v487, 113
      %v495 = vpop.permute.xlu0 %494
      %496 = vrot.lane.b32.xlu0 %v491, 113
      %v497 = vpop.permute.xlu0 %496
      %vm498 = vcmask 924672
      %v499 = vsel %vm498, %v495, %v497
      %v503 = vmul.f32 %v401, %v495
      %v504 = vmul.f32 %v402, %v499
      %v505 = vmul.f32 %v403, %v497
      %506 = vset.pattern.permute.xlu0 2
      %507 = vperm.xlu0 %506, %v292
      %v508 = vpop.permute.xlu0 %507
      %v510 = vmul.f32 %v503, %v508
      %v511 = vmul.f32 %v504, %v508
      %v512 = vmul.f32 %v505, %v508
      %516 = vrot.lane.b32.xlu0 %v510, 126
      %v517 = vpop.permute.xlu0 %516
      %518 = vrot.lane.b32.xlu0 %v511, 126
      %v519 = vpop.permute.xlu0 %518
      %520 = vrot.lane.b32.xlu0 %v512, 126
      %v521 = vpop.permute.xlu0 %520
      %vm522 = vcmask 1031168
      %v523 = vsel %vm522, %v517, %v519
      %v524 = vsel %vm522, %v519, %v521
      %v528 = vadd.f32 %v481, %v523
      %v529 = vadd.f32 %v482, %v524
      %v530 = vadd.f32 %v483, %v521
      %v531 = vlaneseq
      %v532 = vshrl.u32 %v531, 7
      %v533 = vsub.s32 1, %v532
      %v534 = vrot.slane %v327, %v533
      %v535 = vlaneseq
      %v536 = vshrl.u32 %v535, 7
      %v537 = vsub.s32 1, %v536
      %v538 = vrot.slane %v328, %v537
      %541 = vrot.lane.b32.xlu0 %v534, 127
      %v542 = vpop.permute.xlu0 %541
      %543 = vrot.lane.b32.xlu0 %v538, 127
      %v544 = vpop.permute.xlu0 %543
      %v545 = vsel %vm475, %v542, %v544
      %v549 = vmul.f32 %v401, %v542
      %v550 = vmul.f32 %v402, %v545
      %v551 = vmul.f32 %v403, %v544
      %552 = vset.pattern.permute.xlu0 3
      %553 = vperm.xlu0 %552, %v292
      %v554 = vpop.permute.xlu0 %553
      %v556 = vmul.f32 %v549, %v554
      %v557 = vmul.f32 %v550, %v554
      %v558 = vmul.f32 %v551, %v554
      %562 = vrot.lane.b32.xlu0 %v556, 112
      %v563 = vpop.permute.xlu0 %562
      %564 = vrot.lane.b32.xlu0 %v557, 112
      %v565 = vpop.permute.xlu0 %564
      %566 = vrot.lane.b32.xlu0 %v558, 112
      %v567 = vpop.permute.xlu0 %566
      %v568 = vsel %vm451, %v563, %v565
      %v569 = vsel %vm451, %v565, %v567
      %v573 = vadd.f32 %v528, %v568
      %v574 = vadd.f32 %v529, %v569
      %v575 = vadd.f32 %v530, %v567
      %576 = vset.pattern.permute.xlu0 4
      %577 = vperm.xlu0 %576, %v292
      %v578 = vpop.permute.xlu0 %577
      %v580 = vmul.f32 %v402, %v578
      %v581 = vmul.f32 %v403, %v578
      %584 = vrot.lane.b32.xlu0 %v580, 111
      %v585 = vpop.permute.xlu0 %584
      %586 = vrot.lane.b32.xlu0 %v581, 111
      %v587 = vpop.permute.xlu0 %586
      %v588 = vsel %vm418, %v585, %v587
      %v592 = vadd.f32 %v573, %v585
      %v593 = vadd.f32 %v574, %v588
      %v594 = vadd.f32 %v575, %v587
      %v595 = vld [vmem:[#allocation2 + $0x8] sm:$0xff]
      %v596 = vld [vmem:[#allocation2 + $0x10] sm:$0xff]
      %v597 = vld [vmem:[#allocation2 + $0x18] sm:$0xff]
      %v598 = vlaneseq
      %v599 = vshrl.u32 %v598, 7
      %v600 = vsub.s32 1, %v599
      %v601 = vrot.slane %v315, %v600
      %v602 = vlaneseq
      %v603 = vshrl.u32 %v602, 7
      %v604 = vsub.s32 1, %v603
      %v605 = vrot.slane %v316, %v604
      %608 = vrot.lane.b32.xlu0 %v601, 1
      %v609 = vpop.permute.xlu0 %608
      %610 = vrot.lane.b32.xlu0 %v605, 1
      %v611 = vpop.permute.xlu0 %610
      %vm612 = vcmask 7168
      %v613 = vsel %vm612, %v609, %v611
      %v617 = vmul.f32 %v595, %v609
      %v618 = vmul.f32 %v596, %v613
      %v619 = vmul.f32 %v597, %v611
      %620 = vset.pattern.permute.xlu0 5
      %621 = vperm.xlu0 %620, %v292
      %v622 = vpop.permute.xlu0 %621
      %v624 = vmul.f32 %v617, %v622
      %v625 = vmul.f32 %v618, %v622
      %v626 = vmul.f32 %v619, %v622
      %630 = vrot.lane.b32.xlu0 %v624, 110
      %v631 = vpop.permute.xlu0 %630
      %632 = vrot.lane.b32.xlu0 %v625, 110
      %v633 = vpop.permute.xlu0 %632
      %634 = vrot.lane.b32.xlu0 %v626, 110
      %v635 = vpop.permute.xlu0 %634
      %vm636 = vcmask 900096
      %v637 = vsel %vm636, %v631, %v633
      %v638 = vsel %vm636, %v633, %v635
      %v642 = vadd.f32 %v592, %v631
      %v643 = vadd.f32 %v593, %v637
      %v644 = vadd.f32 %v594, %v638
      %v645 = vlaneseq
      %v646 = vshrl.u32 %v645, 7
      %v647 = vsub.s32 2, %v646
      %v648 = vrot.slane %v333, %v647
      %v649 = vlaneseq
      %v650 = vshrl.u32 %v649, 7
      %v651 = vsub.s32 2, %v650
      %v652 = vrot.slane %v334, %v651
      %655 = vrot.lane.b32.xlu0 %v648, 15
      %v656 = vpop.permute.xlu0 %655
      %657 = vrot.lane.b32.xlu0 %v652, 15
      %v658 = vpop.permute.xlu0 %657
      %vm659 = vcmask 121856
      %v660 = vsel %vm659, %v656, %v658
      %v664 = vmul.f32 %v595, %v656
      %v665 = vmul.f32 %v596, %v660
      %v666 = vmul.f32 %v597, %v658
      %667 = vset.pattern.permute.xlu0 6
      %668 = vperm.xlu0 %667, %v292
      %v669 = vpop.permute.xlu0 %668
      %v671 = vmul.f32 %v664, %v669
      %v672 = vmul.f32 %v665, %v669
      %v673 = vmul.f32 %v666, %v669
      %677 = vrot.lane.b32.xlu0 %v671, 96
      %v678 = vpop.permute.xlu0 %677
      %679 = vrot.lane.b32.xlu0 %v672, 96
      %v680 = vpop.permute.xlu0 %679
      %681 = vrot.lane.b32.xlu0 %v673, 96
      %v682 = vpop.permute.xlu0 %681
      %vm683 = vcmask 785408
      %v684 = vsel %vm683, %v678, %v680
      %v685 = vsel %vm683, %v680, %v682
      %v689 = vadd.f32 %v642, %v678
      %v690 = vadd.f32 %v643, %v684
      %v691 = vadd.f32 %v644, %v685
      %v692 = vlaneseq
      %v693 = vshrl.u32 %v692, 7
      %v694 = vsub.s32 2, %v693
      %v695 = vrot.slane %v327, %v694
      %v696 = vlaneseq
      %v697 = vshrl.u32 %v696, 7
      %v698 = vsub.s32 2, %v697
      %v699 = vrot.slane %v328, %v698
      %702 = vrot.lane.b32.xlu0 %v695, 16
      %v703 = vpop.permute.xlu0 %702
      %704 = vrot.lane.b32.xlu0 %v699, 16
      %v705 = vpop.permute.xlu0 %704
      %vm706 = vcmask 130048
      %v707 = vsel %vm706, %v703, %v705
      %v711 = vmul.f32 %v595, %v703
      %v712 = vmul.f32 %v596, %v707
      %v713 = vmul.f32 %v597, %v705
      %714 = vset.pattern.permute.xlu0 7
      %715 = vperm.xlu0 %714, %v292
      %v716 = vpop.permute.xlu0 %715
      %v718 = vmul.f32 %v711, %v716
      %v719 = vmul.f32 %v712, %v716
      %v720 = vmul.f32 %v713, %v716
      %724 = vrot.lane.b32.xlu0 %v718, 95
      %v725 = vpop.permute.xlu0 %724
      %726 = vrot.lane.b32.xlu0 %v719, 95
      %v727 = vpop.permute.xlu0 %726
      %728 = vrot.lane.b32.xlu0 %v720, 95
      %v729 = vpop.permute.xlu0 %728
      %vm730 = vcmask 777216
      %v731 = vsel %vm730, %v725, %v727
      %v732 = vsel %vm730, %v727, %v729
      %v736 = vadd.f32 %v689, %v725
      %v737 = vadd.f32 %v690, %v731
      %v738 = vadd.f32 %v691, %v732
      %v739 = vlaneseq
      %v740 = vshrl.u32 %v739, 7
      %v741 = vsub.s32 2, %v740
      %v742 = vrot.slane %v309, %v741
      %v743 = vlaneseq
      %v744 = vshrl.u32 %v743, 7
      %v745 = vsub.s32 2, %v744
      %v746 = vrot.slane %v310, %v745
      %749 = vrot.lane.b32.xlu0 %v742, 17
      %v750 = vpop.permute.xlu0 %749
      %751 = vrot.lane.b32.xlu0 %v746, 17
      %v752 = vpop.permute.xlu0 %751
      %vm753 = vcmask 138240
      %v754 = vsel %vm753, %v750, %v752
      %v758 = vmul.f32 %v595, %v750
      %v759 = vmul.f32 %v596, %v754
      %v760 = vmul.f32 %v597, %v752
      %761 = vset.pattern.permute.xlu0 8
      %762 = vperm.xlu0 %761, %v292
      %v763 = vpop.permute.xlu0 %762
      %v765 = vmul.f32 %v758, %v763
      %v766 = vmul.f32 %v759, %v763
      %v767 = vmul.f32 %v760, %v763
      %771 = vrot.lane.b32.xlu0 %v765, 94
      %v772 = vpop.permute.xlu0 %771
      %773 = vrot.lane.b32.xlu0 %v766, 94
      %v774 = vpop.permute.xlu0 %773
      %775 = vrot.lane.b32.xlu0 %v767, 94
      %v776 = vpop.permute.xlu0 %775
      %vm777 = vcmask 769024
      %v778 = vsel %vm777, %v772, %v774
      %v779 = vsel %vm777, %v774, %v776
      %v783 = vadd.f32 %v736, %v772
      %v784 = vadd.f32 %v737, %v778
      %v785 = vadd.f32 %v738, %v779
      %v786 = vpack.c.bf16 %v783, %v783
      %v787 = vpack.c.bf16 %v784, %v784
      %v788 = vpack.c.bf16 %v785, %v785
      %790 = vset.pattern.permute.xlu0 0
      %791 = vperm.xlu0 %790, %v299
      %v792 = vpop.permute.xlu0 %791
      %795 = vset.pattern.permute.xlu0 0
      %796 = vperm.xlu0 %795, %v300
      %v797 = vpop.permute.xlu0 %796
      %800 = vset.pattern.permute.xlu0 0
      %801 = vperm.xlu0 %800, %v301
      %v802 = vpop.permute.xlu0 %801
      %805 = vset.pattern.permute.xlu0 0
      %806 = vperm.xlu0 %805, %v302
      %v807 = vpop.permute.xlu0 %806
      %v813 = vunpack.c.l.b16 %v295
      %v814 = vunpack.c.l.b16 %v296
      %v815 = vunpack.c.l.b16 %v297
      %v816 = vunpack.c.l.b16 %v298
      %v817 = vpack.c.b16 %v814, %v813
      %v818 = vpack.c.b16 %v816, %v815
      %822 = vrot.lane.b32.xlu0 %v786, 17
      %v823 = vpop.permute.xlu0 %822
      %824 = vrot.lane.b32.xlu0 %v787, 17
      %v825 = vpop.permute.xlu0 %824
      %826 = vrot.lane.b32.xlu0 %v788, 17
      %v827 = vpop.permute.xlu0 %826
      %vm828 = vcmask 138240
      %v829 = vsel %vm828, %v823, %v825
      %v830 = vsel %vm828, %v825, %v827
      %vm831 = vcmask 64512
      %v833 = vsel %vm831, %v817, 0
      %v836 = vsel %vm831, %v818, 0
      %vm838 = vcmask 1043456
      %v840 = vsel %vm838, %v829, 0
      %v843 = vsel %vm838, %v830, 0
      %845 = vmatprep.subr.bf16.mxu0 0
      %846 = vmatpush1.bf16.msra.mxu0 0
      %847 = vmatprep.subr.bf16.mxu0 0
      %848 = vmatpush1.bf16.msra.mxu0 0
      %849 = vmatprep.subr.bf16.mxu0 0
      %850 = vmatpush1.bf16.msra.mxu0 0
      %851 = vmatprep.subr.bf16.mxu0 0
      %852 = vmatpush1.bf16.msra.mxu0 0
      %853 = vmatprep.subr.bf16.mxu0 0
      %854 = vmatpush1.bf16.msra.mxu0 0
      %855 = vmatprep.subr.bf16.mxu0 0
      %856 = vmatpush1.bf16.msra.mxu0 0
      %857 = vmatprep.subr.bf16.mxu0 0
      %858 = vmatpush1.bf16.msra.mxu0 0
      %859 = vmatprep.subr.bf16.mxu0 %v843
      %860 = vmatpush1.bf16.msra.mxu0 %v840
      %861 = vmatprep.subr.bf16.mxu0 0
      %862 = vmatpush2.bf16.msra.mxu0 0
      %863 = vmatprep.subr.bf16.mxu0 0
      %864 = vmatpush2.bf16.msra.mxu0 0
      %865 = vmatprep.subr.bf16.mxu0 0
      %866 = vmatpush2.bf16.msra.mxu0 0
      %867 = vmatprep.subr.bf16.mxu0 0
      %868 = vmatpush2.bf16.msra.mxu0 0
      %869 = vmatprep.subr.bf16.mxu0 0
      %870 = vmatpush2.bf16.msra.mxu0 0
      %871 = vmatprep.subr.bf16.mxu0 0
      %872 = vmatpush2.bf16.msra.mxu0 0
      %873 = vmatprep.subr.bf16.mxu0 0
      %874 = vmatpush2.bf16.msra.mxu0 0
      %875 = vmatprep.subr.bf16.mxu0 0
      %876 = vmatpush2.bf16.msra.mxu0 0
      %877 = vmatprep.mubr.bf16.mxu0 0
      %878 = vmatmul.mubr.bf16.gmra.mxu0 %v833
      %v879 = vpop.f32.mrf.mxu0
      %v880 = vadd.f32 %v792, %v879
      %v881 = vpop.f32.mrf.mxu0
      %v882 = vadd.f32 %v792, %v881
      %v883 = vpop.f32.mrf.mxu0
      %v884 = vadd.f32 %v797, %v883
      %v885 = vpop.f32.mrf.mxu0
      %v886 = vadd.f32 %v797, %v885
      %887 = vmatprep.mubr.bf16.mxu0 0
      %888 = vmatmul.mubr.bf16.gmra.mxu0 %v836
      %v889 = vpop.f32.mrf.mxu0
      %v890 = vadd.f32 %v802, %v889
      %v891 = vpop.f32.mrf.mxu0
      %v892 = vadd.f32 %v802, %v891
      %v893 = vpop.f32.mrf.mxu0
      %v894 = vadd.f32 %v807, %v893
      %v895 = vpop.f32.mrf.mxu0
      %v896 = vadd.f32 %v807, %v895
      %897 = vdwg.mxu0
      %v898 = vadd.f32 %v880, %v335
      %v899 = vadd.f32 %v882, %v336
      %v900 = vadd.f32 %v884, %v337
      %v901 = vadd.f32 %v886, %v338
      %v902 = vadd.f32 %v890, %v339
      %v903 = vadd.f32 %v892, %v340
      %v904 = vadd.f32 %v894, %v341
      %v905 = vadd.f32 %v896, %v342
      %v906 = vmax.f32 %v898, 0.0
      %v907 = vmax.f32 %v899, 0.0
      %v908 = vmax.f32 %v900, 0.0
      %v909 = vmax.f32 %v901, 0.0
      %v910 = vmax.f32 %v902, 0.0
      %v911 = vmax.f32 %v903, 0.0
      %v912 = vmax.f32 %v904, 0.0
      %v913 = vmax.f32 %v905, 0.0
      %914 = vst [vmem:[%s285] sm:$0xff] %v906
      %915 = vst [vmem:[%s285 + $0x8] sm:$0xff] %v907
      %916 = vst [vmem:[%s285 + $0x10] sm:$0xff] %v908
      %917 = vst [vmem:[%s285 + $0x18] sm:$0xff] %v909
      %918 = vst [vmem:[%s285 + $0x20] sm:$0xff] %v910
      %919 = vst [vmem:[%s285 + $0x28] sm:$0xff] %v911
      %920 = vst [vmem:[%s285 + $0x30] sm:$0xff] %v912
      %921 = vst [vmem:[%s285 + $0x38] sm:$0xff] %v913
      %s922 = scalar_lea.vmem %s278, 64
      %v923 = vld [vmem:[%s922] sm:$0xff]
      %v924 = vld [vmem:[%s922 + $0x8] sm:$0xff]
      %v925 = vld [vmem:[%s922 + $0x10] sm:$0xff]
      %v926 = vld [vmem:[%s922 + $0x18] sm:$0xff]
      %v927 = vld [vmem:[%s922 + $0x20] sm:$0xff]
      %v928 = vld [vmem:[%s922 + $0x28] sm:$0xff]
      %v929 = vld [vmem:[%s922 + $0x30] sm:$0xff]
      %v930 = vld [vmem:[%s922 + $0x38] sm:$0xff]
      %v931 = vpack.c.bf16 %v925, %v923
      %v932 = vpack.c.bf16 %v926, %v924
      %v933 = vpack.c.bf16 %v929, %v927
      %v934 = vpack.c.bf16 %v930, %v928
      %935 = vmatprep.subr.bf16.mxu0 0
      %936 = vmatpush1.bf16.msra.mxu0 0
      %937 = vmatprep.subr.bf16.mxu0 0
      %938 = vmatpush1.bf16.msra.mxu0 0
      %939 = vmatprep.subr.bf16.mxu0 0
      %940 = vmatpush1.bf16.msra.mxu0 0
      %941 = vmatprep.subr.bf16.mxu0 0
      %942 = vmatpush1.bf16.msra.mxu0 0
      %943 = vmatprep.subr.bf16.mxu0 0
      %944 = vmatpush1.bf16.msra.mxu0 0
      %945 = vmatprep.subr.bf16.mxu0 0
      %946 = vmatpush1.bf16.msra.mxu0 0
      %947 = vmatprep.subr.bf16.mxu0 %v934
      %948 = vmatpush1.bf16.msra.mxu0 %v933
      %949 = vmatprep.subr.bf16.mxu0 %v932
      %950 = vmatpush1.bf16.msra.mxu0 %v931
      %951 = vmatprep.subr.bf16.mxu0 0
      %952 = vmatpush2.bf16.msra.mxu0 0
      %953 = vmatprep.subr.bf16.mxu0 0
      %954 = vmatpush2.bf16.msra.mxu0 0
      %955 = vmatprep.subr.bf16.mxu0 0
      %956 = vmatpush2.bf16.msra.mxu0 0
      %957 = vmatprep.subr.bf16.mxu0 0
      %958 = vmatpush2.bf16.msra.mxu0 0
      %959 = vmatprep.subr.bf16.mxu0 0
      %960 = vmatpush2.bf16.msra.mxu0 0
      %961 = vmatprep.subr.bf16.mxu0 0
      %962 = vmatpush2.bf16.msra.mxu0 0
      %963 = vmatprep.subr.bf16.mxu0 0
      %964 = vmatpush2.bf16.msra.mxu0 0
      %965 = vmatprep.subr.bf16.mxu0 0
      %966 = vmatpush2.bf16.msra.mxu0 0
      %967 = vmatprep.mubr.bf16.mxu0 0
      %968 = vmatmul.mubr.bf16.gmra.mxu0 %v354
      %v969 = vpop.f32.mrf.mxu0
      %v970 = vadd.f32 %v350, %v969
      %v971 = vpop.f32.mrf.mxu0
      %v972 = vadd.f32 %v350, %v971
      %v973 = vpop.f32.mrf.mxu0
      %v974 = vpop.f32.mrf.mxu0
      %975 = vdwg.mxu0
      %v976 = vmax.f32 %v970, 0.0
      %v977 = vmax.f32 %v972, 0.0
      %978 = vst [vmem:[#allocation2 + $0x8] sm:$0xff] %v976
      %979 = vst [vmem:[#allocation2 + $0x10] sm:$0xff] %v977
      %v980 = vld [vmem:[#allocation2] sm:$0xff]
      %v981 = vld [vmem:[#allocation2 + $0x8] sm:$0xff]
      %v982 = vld [vmem:[#allocation2 + $0x10] sm:$0xff]
      %v983 = vmul.f32 %v980, %v415
      %v984 = vmul.f32 %v981, %v419
      %v985 = vmul.f32 %v982, %v417
      %v986 = vmul.f32 %v983, %v429
      %v987 = vmul.f32 %v984, %v429
      %v988 = vmul.f32 %v985, %v429
      %v989 = vadd.f32 %v986, 0.0
      %v990 = vadd.f32 %v987, 0.0
      %v991 = vadd.f32 %v988, 0.0
      %v992 = vmul.f32 %v980, %v448
      %v993 = vmul.f32 %v981, %v452
      %v994 = vmul.f32 %v982, %v450
      %v995 = vmul.f32 %v992, %v461
      %v996 = vmul.f32 %v993, %v461
      %v997 = vmul.f32 %v994, %v461
      %1001 = vrot.lane.b32.xlu0 %v995, 127
      %v1002 = vpop.permute.xlu0 %1001
      %1003 = vrot.lane.b32.xlu0 %v996, 127
      %v1004 = vpop.permute.xlu0 %1003
      %1005 = vrot.lane.b32.xlu0 %v997, 127
      %v1006 = vpop.permute.xlu0 %1005
      %v1007 = vsel %vm475, %v1002, %v1004
      %v1008 = vsel %vm475, %v1004, %v1006
      %v1012 = vadd.f32 %v989, %v1007
      %v1013 = vadd.f32 %v990, %v1008
      %v1014 = vadd.f32 %v991, %v1006
      %v1015 = vmul.f32 %v980, %v495
      %v1016 = vmul.f32 %v981, %v499
      %v1017 = vmul.f32 %v982, %v497
      %v1018 = vmul.f32 %v1015, %v508
      %v1019 = vmul.f32 %v1016, %v508
      %v1020 = vmul.f32 %v1017, %v508
      %1024 = vrot.lane.b32.xlu0 %v1018, 126
      %v1025 = vpop.permute.xlu0 %1024
      %1026 = vrot.lane.b32.xlu0 %v1019, 126
      %v1027 = vpop.permute.xlu0 %1026
      %1028 = vrot.lane.b32.xlu0 %v1020, 126
      %v1029 = vpop.permute.xlu0 %1028
      %v1030 = vsel %vm522, %v1025, %v1027
      %v1031 = vsel %vm522, %v1027, %v1029
      %v1035 = vadd.f32 %v1012, %v1030
      %v1036 = vadd.f32 %v1013, %v1031
      %v1037 = vadd.f32 %v1014, %v1029
      %v1038 = vmul.f32 %v980, %v542
      %v1039 = vmul.f32 %v981, %v545
      %v1040 = vmul.f32 %v982, %v544
      %v1041 = vmul.f32 %v1038, %v554
      %v1042 = vmul.f32 %v1039, %v554
      %v1043 = vmul.f32 %v1040, %v554
      %1047 = vrot.lane.b32.xlu0 %v1041, 112
      %v1048 = vpop.permute.xlu0 %1047
      %1049 = vrot.lane.b32.xlu0 %v1042, 112
      %v1050 = vpop.permute.xlu0 %1049
      %1051 = vrot.lane.b32.xlu0 %v1043, 112
      %v1052 = vpop.permute.xlu0 %1051
      %v1053 = vsel %vm451, %v1048, %v1050
      %v1054 = vsel %vm451, %v1050, %v1052
      %v1058 = vadd.f32 %v1035, %v1053
      %v1059 = vadd.f32 %v1036, %v1054
      %v1060 = vadd.f32 %v1037, %v1052
      %v1061 = vmul.f32 %v981, %v578
      %v1062 = vmul.f32 %v982, %v578
      %1065 = vrot.lane.b32.xlu0 %v1061, 111
      %v1066 = vpop.permute.xlu0 %1065
      %1067 = vrot.lane.b32.xlu0 %v1062, 111
      %v1068 = vpop.permute.xlu0 %1067
      %v1069 = vsel %vm418, %v1066, %v1068
      %v1073 = vadd.f32 %v1058, %v1066
      %v1074 = vadd.f32 %v1059, %v1069
      %v1075 = vadd.f32 %v1060, %v1068
      %v1076 = vld [vmem:[#allocation2 + $0x8] sm:$0xff]
      %v1077 = vld [vmem:[#allocation2 + $0x10] sm:$0xff]
      %v1078 = vld [vmem:[#allocation2 + $0x18] sm:$0xff]
      %v1079 = vmul.f32 %v1076, %v609
      %v1080 = vmul.f32 %v1077, %v613
      %v1081 = vmul.f32 %v1078, %v611
      %v1082 = vmul.f32 %v1079, %v622
      %v1083 = vmul.f32 %v1080, %v622
      %v1084 = vmul.f32 %v1081, %v622
      %1088 = vrot.lane.b32.xlu0 %v1082, 110
      %v1089 = vpop.permute.xlu0 %1088
      %1090 = vrot.lane.b32.xlu0 %v1083, 110
      %v1091 = vpop.permute.xlu0 %1090
      %1092 = vrot.lane.b32.xlu0 %v1084, 110
      %v1093 = vpop.permute.xlu0 %1092
      %v1094 = vsel %vm636, %v1089, %v1091
      %v1095 = vsel %vm636, %v1091, %v1093
      %v1099 = vadd.f32 %v1073, %v1089
      %v1100 = vadd.f32 %v1074, %v1094
      %v1101 = vadd.f32 %v1075, %v1095
      %v1102 = vmul.f32 %v1076, %v656
      %v1103 = vmul.f32 %v1077, %v660
      %v1104 = vmul.f32 %v1078, %v658
      %v1105 = vmul.f32 %v1102, %v669
      %v1106 = vmul.f32 %v1103, %v669
      %v1107 = vmul.f32 %v1104, %v669
      %1111 = vrot.lane.b32.xlu0 %v1105, 96
      %v1112 = vpop.permute.xlu0 %1111
      %1113 = vrot.lane.b32.xlu0 %v1106, 96
      %v1114 = vpop.permute.xlu0 %1113
      %1115 = vrot.lane.b32.xlu0 %v1107, 96
      %v1116 = vpop.permute.xlu0 %1115
      %v1117 = vsel %vm683, %v1112, %v1114
      %v1118 = vsel %vm683, %v1114, %v1116
      %v1122 = vadd.f32 %v1099, %v1112
      %v1123 = vadd.f32 %v1100, %v1117
      %v1124 = vadd.f32 %v1101, %v1118
      %v1125 = vmul.f32 %v1076, %v703
      %v1126 = vmul.f32 %v1077, %v707
      %v1127 = vmul.f32 %v1078, %v705
      %v1128 = vmul.f32 %v1125, %v716
      %v1129 = vmul.f32 %v1126, %v716
      %v1130 = vmul.f32 %v1127, %v716
      %1134 = vrot.lane.b32.xlu0 %v1128, 95
      %v1135 = vpop.permute.xlu0 %1134
      %1136 = vrot.lane.b32.xlu0 %v1129, 95
      %v1137 = vpop.permute.xlu0 %1136
      %1138 = vrot.lane.b32.xlu0 %v1130, 95
      %v1139 = vpop.permute.xlu0 %1138
      %v1140 = vsel %vm730, %v1135, %v1137
      %v1141 = vsel %vm730, %v1137, %v1139
      %v1145 = vadd.f32 %v1122, %v1135
      %v1146 = vadd.f32 %v1123, %v1140
      %v1147 = vadd.f32 %v1124, %v1141
      %v1148 = vmul.f32 %v1076, %v750
      %v1149 = vmul.f32 %v1077, %v754
      %v1150 = vmul.f32 %v1078, %v752
      %v1151 = vmul.f32 %v1148, %v763
      %v1152 = vmul.f32 %v1149, %v763
      %v1153 = vmul.f32 %v1150, %v763
      %1157 = vrot.lane.b32.xlu0 %v1151, 94
      %v1158 = vpop.permute.xlu0 %1157
      %1159 = vrot.lane.b32.xlu0 %v1152, 94
      %v1160 = vpop.permute.xlu0 %1159
      %1161 = vrot.lane.b32.xlu0 %v1153, 94
      %v1162 = vpop.permute.xlu0 %1161
      %v1163 = vsel %vm777, %v1158, %v1160
      %v1164 = vsel %vm777, %v1160, %v1162
      %v1168 = vadd.f32 %v1145, %v1158
      %v1169 = vadd.f32 %v1146, %v1163
      %v1170 = vadd.f32 %v1147, %v1164
      %v1171 = vpack.c.bf16 %v1168, %v1168
      %v1172 = vpack.c.bf16 %v1169, %v1169
      %v1173 = vpack.c.bf16 %v1170, %v1170
      %1177 = vrot.lane.b32.xlu0 %v1171, 17
      %v1178 = vpop.permute.xlu0 %1177
      %1179 = vrot.lane.b32.xlu0 %v1172, 17
      %v1180 = vpop.permute.xlu0 %1179
      %1181 = vrot.lane.b32.xlu0 %v1173, 17
      %v1182 = vpop.permute.xlu0 %1181
      %v1183 = vsel %vm828, %v1178, %v1180
      %v1184 = vsel %vm828, %v1180, %v1182
      %v1186 = vsel %vm838, %v1183, 0
      %v1189 = vsel %vm838, %v1184, 0
      %1191 = vmatprep.subr.bf16.mxu0 0
      %1192 = vmatpush1.bf16.msra.mxu0 0
      %1193 = vmatprep.subr.bf16.mxu0 0
      %1194 = vmatpush1.bf16.msra.mxu0 0
      %1195 = vmatprep.subr.bf16.mxu0 0
      %1196 = vmatpush1.bf16.msra.mxu0 0
      %1197 = vmatprep.subr.bf16.mxu0 0
      %1198 = vmatpush1.bf16.msra.mxu0 0
      %1199 = vmatprep.subr.bf16.mxu0 0
      %1200 = vmatpush1.bf16.msra.mxu0 0
      %1201 = vmatprep.subr.bf16.mxu0 0
      %1202 = vmatpush1.bf16.msra.mxu0 0
      %1203 = vmatprep.subr.bf16.mxu0 0
      %1204 = vmatpush1.bf16.msra.mxu0 0
      %1205 = vmatprep.subr.bf16.mxu0 %v1189
      %1206 = vmatpush1.bf16.msra.mxu0 %v1186
      %1207 = vmatprep.subr.bf16.mxu0 0
      %1208 = vmatpush2.bf16.msra.mxu0 0
      %1209 = vmatprep.subr.bf16.mxu0 0
      %1210 = vmatpush2.bf16.msra.mxu0 0
      %1211 = vmatprep.subr.bf16.mxu0 0
      %1212 = vmatpush2.bf16.msra.mxu0 0
      %1213 = vmatprep.subr.bf16.mxu0 0
      %1214 = vmatpush2.bf16.msra.mxu0 0
      %1215 = vmatprep.subr.bf16.mxu0 0
      %1216 = vmatpush2.bf16.msra.mxu0 0
      %1217 = vmatprep.subr.bf16.mxu0 0
      %1218 = vmatpush2.bf16.msra.mxu0 0
      %1219 = vmatprep.subr.bf16.mxu0 0
      %1220 = vmatpush2.bf16.msra.mxu0 0
      %1221 = vmatprep.subr.bf16.mxu0 0
      %1222 = vmatpush2.bf16.msra.mxu0 0
      %1223 = vmatprep.mubr.bf16.mxu0 0
      %1224 = vmatmul.mubr.bf16.gmra.mxu0 %v833
      %v1225 = vpop.f32.mrf.mxu0
      %v1226 = vadd.f32 %v792, %v1225
      %v1227 = vpop.f32.mrf.mxu0
      %v1228 = vadd.f32 %v792, %v1227
      %v1229 = vpop.f32.mrf.mxu0
      %v1230 = vadd.f32 %v797, %v1229
      %v1231 = vpop.f32.mrf.mxu0
      %v1232 = vadd.f32 %v797, %v1231
      %1233 = vmatprep.mubr.bf16.mxu0 0
      %1234 = vmatmul.mubr.bf16.gmra.mxu0 %v836
      %v1235 = vpop.f32.mrf.mxu0
      %v1236 = vadd.f32 %v802, %v1235
      %v1237 = vpop.f32.mrf.mxu0
      %v1238 = vadd.f32 %v802, %v1237
      %v1239 = vpop.f32.mrf.mxu0
      %v1240 = vadd.f32 %v807, %v1239
      %v1241 = vpop.f32.mrf.mxu0
      %v1242 = vadd.f32 %v807, %v1241
      %1243 = vdwg.mxu0
      %v1244 = vadd.f32 %v1226, %v923
      %v1245 = vadd.f32 %v1228, %v924
      %v1246 = vadd.f32 %v1230, %v925
      %v1247 = vadd.f32 %v1232, %v926
      %v1248 = vadd.f32 %v1236, %v927
      %v1249 = vadd.f32 %v1238, %v928
      %v1250 = vadd.f32 %v1240, %v929
      %v1251 = vadd.f32 %v1242, %v930
      %v1252 = vmax.f32 %v1244, 0.0
      %v1253 = vmax.f32 %v1245, 0.0
      %v1254 = vmax.f32 %v1246, 0.0
      %v1255 = vmax.f32 %v1247, 0.0
      %v1256 = vmax.f32 %v1248, 0.0
      %v1257 = vmax.f32 %v1249, 0.0
      %v1258 = vmax.f32 %v1250, 0.0
      %v1259 = vmax.f32 %v1251, 0.0
      %s1260 = scalar_lea.vmem %s285, 64
      %1261 = vst [vmem:[%s1260] sm:$0xff] %v1252
      %1262 = vst [vmem:[%s1260 + $0x8] sm:$0xff] %v1253
      %1263 = vst [vmem:[%s1260 + $0x10] sm:$0xff] %v1254
      %1264 = vst [vmem:[%s1260 + $0x18] sm:$0xff] %v1255
      %1265 = vst [vmem:[%s1260 + $0x20] sm:$0xff] %v1256
      %1266 = vst [vmem:[%s1260 + $0x28] sm:$0xff] %v1257
      %1267 = vst [vmem:[%s1260 + $0x30] sm:$0xff] %v1258
      %1268 = vst [vmem:[%s1260 + $0x38] sm:$0xff] %v1259
      %s1269 = smul.u32 2, %s18
      %p1270 = scmp.lt.s32.totalorder %s1269, 3
      %s1271 = scalar_select %p1270, %s1269, 3
      %s1272 = smul.addr %s1271, 8
      %s1273 = smul.addr %s1272, 8
      %s1274 = scalar_lea.vmem %s7, %s1273
      // Predicated region
      $region49: #{shufflenet_unit_pallas.1} parent=47 // pred_check
        %p1275 = pneg %p188
      $region50: #{shufflenet_unit_pallas.1} parent=47 // pred_check_branch
        %1277 = sbr.rel (%p1275) target = $region52
      $region51: #{shufflenet_unit_pallas.1} parent=47 // pred_region
        %s1278 = smul.u32 2, %s18
      $region52: #{shufflenet_unit_pallas.1} parent=47 // pred_fallthru
        _
    $region48: #{shufflenet_unit_pallas.1} parent=5 // pred_fallthru
      _
    %p1279 = scmp.le.s32.totalorder 2, %s13
    // Predicated region
    $region53: #{shufflenet_unit_pallas.1} parent=5 // pred_check
      %p1280 = pneg %p1279
    $region54: #{shufflenet_unit_pallas.1} parent=5 // pred_check_branch
      %1282 = sbr.rel (%p1280) target = $region56
    $region55: #{shufflenet_unit_pallas.1} parent=5 // pred_region
      %s1283 = ssub.s32 %s13, 2
      // Predicated region
      $region57: #{shufflenet_unit_pallas.1} parent=55 // pred_check
        %p1284 = pneg %p194
      $region58: #{shufflenet_unit_pallas.1} parent=55 // pred_check_branch
        %1286 = sbr.rel (%p1284) target = $region60
      $region59: #{shufflenet_unit_pallas.1} parent=55 // pred_region
        %s1287 = smul.u32 2, %s19
        %p1288 = scmp.lt.s32.totalorder %s1287, 3
        %s1289 = scalar_select %p1288, %s1287, 3
        %s1290 = smul.addr %s1289, 8
        %s1291 = smul.addr %s1290, 8
        %s1292 = scalar_lea.vmem %s7, %s1291
      $region60: #{shufflenet_unit_pallas.1} parent=55 // pred_fallthru
        _
    $region56: #{shufflenet_unit_pallas.1} parent=5 // pred_fallthru
      _
  $region6: #{shufflenet_unit_pallas.1} parent=0 // loop_footer
    %s17 = sadd.s32 1, %s13
  $region7: #{shufflenet_unit_pallas.1} parent=0 // loop_footer_branch
    %12 = sbr.rel target = $region3
  $region8: #{shufflenet_unit_pallas.1} parent=0 // loop_exit
    _

</llo_original>
